<compile_context>
chip_gen: v7x
topology: tpu7x:2x2x1
jax: 0.10.0
libtpu: 0.0.40
codegen_flags: <defaults>
</compile_context>

<pallas_src>
import functools

import jax
import jax.numpy as jnp
from jax import lax
from jax.experimental import pallas as pl
from jax.experimental.pallas import tpu as pltpu

N_EMBD = 384      # n_embd in the PyTorch module
BLOCK_SIZE = 256  # max sequence length (tril buffer size)


def _head_kernel(x_ref, wqkv_ref, o_ref, *, seq_len, hpad):
    # x_ref:    (BB, T, C) block (BB batch elements per grid step)
    # wqkv_ref: (C, 3*HPAD) bf16, [K | Q(scaled) | V] each zero-padded to HPAD lanes
    # o_ref:    (BB, T, HPAD) lane-dense output block
    x = x_ref[...].astype(jnp.bfloat16)                                  # (BB, T, C)

    # Fused QKV projection, f32 accumulation on the MXU.
    qkv = jnp.einsum('btc,cd->btd', x, wqkv_ref[...],
                     preferred_element_type=jnp.float32)                 # (BB, T, 3*HPAD)

    # 128-lane-aligned slices (no mid-vreg re-packing). Scale already folded
    # into the Q weights in the wrapper.
    k = qkv[:, :, 0:hpad]                                                # (BB, T, HPAD)
    q = qkv[:, :, hpad:2 * hpad]                                         # (BB, T, HPAD)
    v = qkv[:, :, 2 * hpad:3 * hpad]                                     # (BB, T, HPAD)

    # Scores: contract on the last (padded-head) axis; padded zero columns
    # contribute nothing. (Note: check lower_as_mlir for vxpose if tuning.)
    wei = jnp.einsum('bqh,bkh->bqk',
                     q.astype(jnp.bfloat16), k.astype(jnp.bfloat16),
                     preferred_element_type=jnp.float32)                 # (BB, T, T)

    # Causal mask (tril): positions with col > row get -inf.
    row = lax.broadcasted_iota(jnp.int32, (1, seq_len, seq_len), 1)
    col = lax.broadcasted_iota(jnp.int32, (1, seq_len, seq_len), 2)
    wei = jnp.where(col <= row, wei, -jnp.inf)

    # Numerically stable exp; normalization deferred to after the V matmul.
    m = jnp.max(wei, axis=-1, keepdims=True)                             # (BB, T, 1)
    p = jnp.exp(wei - m)                                                 # (BB, T, T)
    l = jnp.sum(p, axis=-1, keepdims=True)                               # (BB, T, 1)

    out = jnp.einsum('bqk,bkh->bqh',
                     p.astype(jnp.bfloat16), v.astype(jnp.bfloat16),
                     preferred_element_type=jnp.float32)                 # (BB, T, HPAD)

    # Deferred, exact normalization: only touches (BB, T, HPAD), not (T, T).
    out = out * (1.0 / l)

    # (dropout = identity in eval mode)
    o_ref[...] = out.astype(o_ref.dtype)


def head_forward(x, w_key, w_query, w_value, *, batch_block=1):
    """x: (B, T, C) float32; w_*: (H, C) PyTorch-layout Linear weights (no bias).

    batch_block: batch elements per grid step. Keep 1 (grid=(B,), "parallel")
    so v7x's two TensorCores split the batch; raise to 4-8 on single-TC chips
    (v5e/v6e) to amortize per-step overhead when B is large.
    """
    B, T, C = x.shape
    H = w_key.shape[0]
    assert C == N_EMBD and T <= BLOCK_SIZE
    assert B % batch_block == 0

    HPAD = ((H + 127) // 128) * 128  # lane-tile aligned head width

    # Fold the C**-0.5 scale into the query weights (fuses into the existing
    # transpose/pad/cast in XLA), pad each head block to HPAD lanes, fuse to
    # (C, 3*HPAD) bf16 for the MXU.
    scale = jnp.float32(C) ** jnp.float32(-0.5)

    def pad_cols(w_t):  # w_t: (C, H) -> (C, HPAD)
        return jnp.pad(w_t, ((0, 0), (0, HPAD - H)))

    w_qkv = jnp.concatenate(
        [pad_cols(w_key.T), pad_cols((w_query * scale).T), pad_cols(w_value.T)],
        axis=1).astype(jnp.bfloat16)                                     # (C, 3*HPAD)

    kernel = functools.partial(_head_kernel, seq_len=T, hpad=HPAD)

    # Advisory cost estimate so XLA schedules this small call sensibly.
    flops = int(2 * B * (T * C * 3 * HPAD + 2 * T * T * HPAD))
    bytes_accessed = int(x.size * x.dtype.itemsize
                         + w_qkv.size * w_qkv.dtype.itemsize
                         + B * T * HPAD * x.dtype.itemsize)
    cost = pl.CostEstimate(flops=flops,
                           transcendentals=int(B * T * T),
                           bytes_accessed=bytes_accessed)

    out_padded = pl.pallas_call(
        kernel,
        out_shape=jax.ShapeDtypeStruct((B, T, HPAD), x.dtype),
        grid=(B // batch_block,),
        in_specs=[
            pl.BlockSpec((batch_block, T, C), lambda b: (b, 0, 0)),
            pl.BlockSpec((C, 3 * HPAD), lambda b: (0, 0)),
        ],
        out_specs=pl.BlockSpec((batch_block, T, HPAD), lambda b: (b, 0, 0)),
        compiler_params=pltpu.CompilerParams(
            dimension_semantics=("parallel",)),
        cost_estimate=cost,
    )(x, w_qkv)

    if HPAD == H:
        return out_padded
    return out_padded[:, :, :H]


def head_reference(x, w_key, w_query, w_value):
    """Pure-JAX f32 reference mirroring the PyTorch forward (eval mode)."""
    B, T, C = x.shape
    k = x @ w_key.T
    q = x @ w_query.T
    v = x @ w_value.T
    wei = (q @ jnp.swapaxes(k, -2, -1)) * (C ** -0.5)
    mask = jnp.tril(jnp.ones((T, T), dtype=bool))
    wei = jnp.where(mask, wei, -jnp.inf)
    wei = jax.nn.softmax(wei, axis=-1)
    return wei @ v


if __name__ == "__main__":
    key = jax.random.PRNGKey(0)
    B, T, C, HEAD_SIZE = 2, 128, N_EMBD, 64

    kx, kk, kq, kv = jax.random.split(key, 4)
    x = jax.random.normal(kx, (B, T, C), dtype=jnp.float32)
    # Deterministic weight init (PyTorch Linear shapes: (head_size, n_embd)).
    bound = C ** -0.5
    w_key = jax.random.uniform(kk, (HEAD_SIZE, C), jnp.float32, -bound, bound)
    w_query = jax.random.uniform(kq, (HEAD_SIZE, C), jnp.float32, -bound, bound)
    w_value = jax.random.uniform(kv, (HEAD_SIZE, C), jnp.float32, -bound, bound)

    out = head_forward(x, w_key, w_query, w_value)
    out = jax.block_until_ready(out)

    ref = head_reference(x, w_key, w_query, w_value)
    assert out.shape == (B, T, HEAD_SIZE)
    # bf16 MXU operands (f32 accumulation) -> relaxed tolerance vs f32 reference.
    assert jnp.allclose(out, ref, atol=3e-2, rtol=3e-2), "mismatch vs reference"

    print("KERNEL_OK")
</pallas_src>

<mosaic_0001>
module attributes {stable_mosaic.version = 11 : i64} {
  func.func @_head_kernel(%arg0: i32, %arg1: memref<1x128x384xf32, #tpu.memory_space<vmem>>, %arg2: memref<384x384xbf16, #tpu.memory_space<vmem>>, %arg3: memref<1x128x128xf32, #tpu.memory_space<vmem>>) attributes {dimension_semantics = [#tpu.dimension_semantics<parallel>], iteration_bounds = array<i64: 2>, scalar_prefetch = 0 : i64, scratch_operands = 0 : i64, tpu.core_type = #tpu.core_type<tc>, window_params = [{transform_indices = @transform_0, window_bounds = array<i64: 1, 128, 384>}, {pipeline_mode = #tpu.pipeline_mode<synchronous>, transform_indices = @transform_1, window_bounds = array<i64: 384, 384>}, {transform_indices = @transform_2, window_bounds = array<i64: 1, 128, 128>}]} {
    %c0 = arith.constant 0 : index
    %c0_0 = arith.constant 0 : index
    %c0_1 = arith.constant 0 : index
    %0 = vector.load %arg1[%c0, %c0_0, %c0_1] : memref<1x128x384xf32, #tpu.memory_space<vmem>>, vector<1x128x384xf32>
    %1 = arith.truncf %0 : vector<1x128x384xf32> to vector<1x128x384xbf16>
    %c0_2 = arith.constant 0 : index
    %c0_3 = arith.constant 0 : index
    %2 = vector.load %arg2[%c0_2, %c0_3] : memref<384x384xbf16, #tpu.memory_space<vmem>>, vector<384x384xbf16>
    "tpu.trace_start"() <{level = 10 : i32, message = "btc,cd->btd"}> : () -> ()
    %cst = arith.constant dense<0.000000e+00> : vector<1x128x384xf32>
    %3 = tpu.matmul %1, %2, %cst {dimension_numbers = #tpu.dot_dimension_numbers<[2], [0], [0, 1], [1], [0, 0, 0, 1, 1, 1], [], []>} : vector<1x128x384xbf16>, vector<384x384xbf16>, vector<1x128x384xf32> -> vector<1x128x384xf32>
    "tpu.trace_stop"() : () -> ()
    %4 = vector.extract_strided_slice %3 {offsets = [0, 0, 0], sizes = [1, 128, 128], strides = [1, 1, 1]} : vector<1x128x384xf32> to vector<1x128x128xf32>
    %5 = vector.extract_strided_slice %3 {offsets = [0, 0, 128], sizes = [1, 128, 128], strides = [1, 1, 1]} : vector<1x128x384xf32> to vector<1x128x128xf32>
    %6 = vector.extract_strided_slice %3 {offsets = [0, 0, 256], sizes = [1, 128, 128], strides = [1, 1, 1]} : vector<1x128x384xf32> to vector<1x128x128xf32>
    %7 = arith.truncf %5 : vector<1x128x128xf32> to vector<1x128x128xbf16>
    %8 = arith.truncf %4 : vector<1x128x128xf32> to vector<1x128x128xbf16>
    "tpu.trace_start"() <{level = 10 : i32, message = "bqh,bkh->bqk"}> : () -> ()
    %cst_4 = arith.constant dense<0.000000e+00> : vector<1x128x128xf32>
    %9 = tpu.matmul %7, %8, %cst_4 {dimension_numbers = #tpu.dot_dimension_numbers<[2], [2], [1], [1], [0, 0, 0, 1, 1, 1], [0], [0]>} : vector<1x128x128xbf16>, vector<1x128x128xbf16>, vector<1x128x128xf32> -> vector<1x128x128xf32>
    "tpu.trace_stop"() : () -> ()
    %10 = tpu.iota {dimensions = array<i32: 1>} : vector<1x128x128xi32>
    %11 = tpu.iota {dimensions = array<i32: 2>} : vector<1x128x128xi32>
    %12 = arith.cmpi sle, %11, %10 : vector<1x128x128xi32>
    %cst_5 = arith.constant 0xFF800000 : f32
    %13 = vector.broadcast %cst_5 : f32 to vector<1x128x128xf32>
    %14 = arith.select %12, %9, %13 : vector<1x128x128xi1>, vector<1x128x128xf32>
    %cst_6 = arith.constant dense<0xFF800000> : vector<1x128xf32>
    %15 = vector.multi_reduction <maximumf>, %14, %cst_6 [2] : vector<1x128x128xf32> to vector<1x128xf32>
    %16 = vector.shape_cast %15 : vector<1x128xf32> to vector<1x128x1xf32>
    %17 = vector.broadcast %16 : vector<1x128x1xf32> to vector<1x128x128xf32>
    %18 = arith.subf %14, %17 : vector<1x128x128xf32>
    %19 = math.exp %18 : vector<1x128x128xf32>
    %cst_7 = arith.constant dense<0.000000e+00> : vector<1x128xf32>
    %20 = vector.multi_reduction <add>, %19, %cst_7 [2] : vector<1x128x128xf32> to vector<1x128xf32>
    %21 = vector.shape_cast %20 : vector<1x128xf32> to vector<1x128x1xf32>
    %22 = arith.truncf %19 : vector<1x128x128xf32> to vector<1x128x128xbf16>
    %23 = arith.truncf %6 : vector<1x128x128xf32> to vector<1x128x128xbf16>
    "tpu.trace_start"() <{level = 10 : i32, message = "bqk,bkh->bqh"}> : () -> ()
    %cst_8 = arith.constant dense<0.000000e+00> : vector<1x128x128xf32>
    %24 = tpu.matmul %22, %23, %cst_8 {dimension_numbers = #tpu.dot_dimension_numbers<[2], [1], [1], [2], [0, 0, 0, 1, 1, 2], [0], [0]>} : vector<1x128x128xbf16>, vector<1x128x128xbf16>, vector<1x128x128xf32> -> vector<1x128x128xf32>
    "tpu.trace_stop"() : () -> ()
    %cst_9 = arith.constant 1.000000e+00 : f32
    %25 = vector.broadcast %cst_9 : f32 to vector<1x128x1xf32>
    %26 = arith.divf %25, %21 : vector<1x128x1xf32>
    %27 = vector.broadcast %26 : vector<1x128x1xf32> to vector<1x128x128xf32>
    %28 = arith.mulf %24, %27 : vector<1x128x128xf32>
    %c0_10 = arith.constant 0 : index
    %c0_11 = arith.constant 0 : index
    %c0_12 = arith.constant 0 : index
    %29 = vector.load %arg3[%c0_10, %c0_11, %c0_12] : memref<1x128x128xf32, #tpu.memory_space<vmem>>, vector<1x128x128xf32>
    tpu.vector_store %arg3[%c0_10, %c0_11, %c0_12], %28 {strides = array<i32>} : memref<1x128x128xf32, #tpu.memory_space<vmem>>, vector<1x128x128xf32>,
    return
  }
  func.func @transform_0(%arg0: i32) -> (i32, i32, i32) {
    %c0_i32 = arith.constant 0 : i32
    %c0_i32_0 = arith.constant 0 : i32
    %c0_i32_1 = arith.constant 0 : i32
    return %arg0, %c0_i32, %c0_i32_0 : i32, i32, i32
  }
  func.func @transform_1(%arg0: i32) -> (i32, i32) {
    %c0_i32 = arith.constant 0 : i32
    %c0_i32_0 = arith.constant 0 : i32
    %c0_i32_1 = arith.constant 0 : i32
    return %c0_i32, %c0_i32_0 : i32, i32
  }
  func.func @transform_2(%arg0: i32) -> (i32, i32, i32) {
    %c0_i32 = arith.constant 0 : i32
    %c0_i32_0 = arith.constant 0 : i32
    %c0_i32_1 = arith.constant 0 : i32
    return %arg0, %c0_i32, %c0_i32_0 : i32, i32, i32
  }
}

</mosaic_0001>

<llo_original>
// kernel: tpu_custom_call.1
$region0: #{tpu_custom_call.1}
  #allocation0 [shape = 'u32[]', space=smem, size = 0x4, offset = 0x4, fixed_abs, tag = 'smem constant byte address 0x4 - core index']
  #allocation1 [shape = 'u32[144,128]{1,0:T(1,128)}', space=vmem, size = 0x12000, scoped, tag = 'internal scratch']
  %s0 = inlined_call_operand.hbm [shape: f32[2,128,384], index: 0, kind: input, shape index: {}]
  %s1 = inlined_call_operand.hbm [shape: bf16[384,384], index: 1, kind: input, shape index: {}]
  %s2 = inlined_call_operand.hbm [shape: f32[2,128,128], index: 2, kind: output, shape index: {}]
  %s3 = sld [smem:[#allocation0]]
  $region49: #{tpu_custom_call.1} parent=0
    _
  %s5 = ssub.s32 1, %s3
  %s6 = scalar_select 0, %s5, %s3
  $region1: #{tpu_custom_call.1} parent=0
    #allocation2 [shape = 'u8[393216]{0}', space=vmem, size = 0x60000, scoped, tag = 'input window, operand 0']
    #allocation3 [shape = 's32[2]{0}', space=sflag, size = 0x8, scoped, tag = 'scoped memory for tpu_custom_call.1']
    #allocation4 [shape = 's32[2]{0}', space=sflag, size = 0x8, scoped, tag = 'scoped memory for tpu_custom_call.1']
    #allocation5 [shape = 'u8[294912]{0}', space=vmem, size = 0x48000, scoped, tag = 'input window, operand 1, single buffered']
    #allocation6 [shape = 's32[1]{0}', space=sflag, size = 0x4, scoped, tag = 'scoped memory for tpu_custom_call.1']
    #allocation7 [shape = 'u8[131072]{0}', space=vmem, size = 0x20000, scoped, tag = 'output window, operand 0']
    %7 = vsyncpa [#allocation3], 0
    %s8 = scalar_lea.sflag [#allocation3], 1
    %9 = vsyncpa %s8, 0
    %10 = vsyncpa [#allocation6], 0
    %11 = vsyncpa [#allocation4], 0
    %s12 = scalar_lea.sflag [#allocation4], 1
    %13 = vsyncpa %s12, 0
    loop: start=0, step=1, limit=4
    $region2: #{tpu_custom_call.1} parent=1 // loop_pre_header
      _
    $region3: #{tpu_custom_call.1} parent=1 // loop_header
      %s15 = sphi 0, %s19
      %p16 = scmp.ge.s32.totalorder %s15, 4
      %s25 = sphi 0, %s27
      %s28 = sphi 0, %s25
      %s29 = sphi 0, %s28
      %s45 = sphi 0, %s29
      %s49 = sphi 0, %s49
      %s51 = sphi 0, %s49
      %s52 = sphi 0, %s51
      %s66 = sphi 0, %s52
      %s72 = sphi 0, %s74
      %s75 = sphi 0, %s72
      %s76 = sphi 0, %s75
      %s92 = sphi 0, %s76
    $region4: #{tpu_custom_call.1} parent=1 // loop_header_branch
      %18 = sbr.rel (%p16) target = $region8
    $region5: #{tpu_custom_call.1} parent=1 // loop_body
      %s20 = ssub.s32 %s15, 1
      %s21 = ssub.s32 %s15, 2
      %s22 = sadd.s32 %s15, 1
      %s23 = ssub.s32 %s15, %s22
      %p24 = scmp.eq.s32.totalorder %s23, 0
      %s26 = sadd.s32 %s25, 1
      %s27 = scalar_select %p24, %s25, %s26
      %p30 = pneg %p24
      %p31 = scmp.eq.s32.totalorder %s15, 1
      %p32 = por %p30, %p31
      %p33 = scmp.ne.s32.totalorder %s25, %s28
      %p34 = scmp.eq.s32.totalorder %s15, 0
      %p35 = por %p33, %p34
      %p36 = scmp.ne.s32.totalorder %s25, %s28
      %p37 = scmp.eq.s32.totalorder %s20, 1
      %p38 = por %p36, %p37
      %p39 = scmp.ne.s32.totalorder %s28, %s29
      %p40 = scmp.eq.s32.totalorder %s20, 0
      %p41 = por %p39, %p40
      %p42 = scmp.ne.s32.totalorder %s28, %s29
      %p43 = scmp.eq.s32.totalorder %s21, 1
      %p44 = por %p42, %p43
      %p46 = scmp.ne.s32.totalorder %s29, %s45
      %p47 = scmp.eq.s32.totalorder %s21, 0
      %p48 = por %p46, %p47
      %s50 = sadd.s32 %s49, 1
      %p53 = scmp.eq.s32.totalorder %s15, 1
      %p54 = scmp.ne.s32.totalorder %s49, %s51
      %p55 = scmp.eq.s32.totalorder %s15, 0
      %p56 = por %p54, %p55
      %p57 = scmp.ne.s32.totalorder %s49, %s51
      %p58 = scmp.eq.s32.totalorder %s20, 1
      %p59 = por %p57, %p58
      %p60 = scmp.ne.s32.totalorder %s51, %s52
      %p61 = scmp.eq.s32.totalorder %s20, 0
      %p62 = por %p60, %p61
      %p63 = scmp.ne.s32.totalorder %s51, %s52
      %p64 = scmp.eq.s32.totalorder %s21, 1
      %p65 = por %p63, %p64
      %p67 = scmp.ne.s32.totalorder %s52, %s66
      %p68 = scmp.eq.s32.totalorder %s21, 0
      %p69 = por %p67, %p68
      %s70 = ssub.s32 %s15, %s22
      %p71 = scmp.eq.s32.totalorder %s70, 0
      %s73 = sadd.s32 %s72, 1
      %s74 = scalar_select %p71, %s72, %s73
      %p77 = pneg %p71
      %p78 = scmp.eq.s32.totalorder %s15, 1
      %p79 = por %p77, %p78
      %p80 = scmp.ne.s32.totalorder %s72, %s75
      %p81 = scmp.eq.s32.totalorder %s15, 0
      %p82 = por %p80, %p81
      %p83 = scmp.ne.s32.totalorder %s72, %s75
      %p84 = scmp.eq.s32.totalorder %s20, 1
      %p85 = por %p83, %p84
      %p86 = scmp.ne.s32.totalorder %s75, %s76
      %p87 = scmp.eq.s32.totalorder %s20, 0
      %p88 = por %p86, %p87
      %p89 = scmp.ne.s32.totalorder %s75, %s76
      %p90 = scmp.eq.s32.totalorder %s21, 1
      %p91 = por %p89, %p90
      %p93 = scmp.ne.s32.totalorder %s76, %s92
      %p94 = scmp.eq.s32.totalorder %s21, 0
      %p95 = por %p93, %p94
      %p96 = scmp.le.s32.totalorder 1, %s15
      %p97 = scmp.lt.s32.totalorder %s15, 3
      %p98 = pnand %p96, %p97
      %p99 = pneg %p98
      // Predicated region
      $region9: #{tpu_custom_call.1} parent=5 // pred_check
        _
      $region10: #{tpu_custom_call.1} parent=5 // pred_check_branch
        %101 = sbr.rel (%p98) target = $region12
      $region11: #{tpu_custom_call.1} parent=5 // pred_region
        %s102 = ssub.s32 %s15, 1
        // Predicated region
        $region13: #{tpu_custom_call.1} parent=11 // pred_check
          %p103 = pneg %p62
        $region14: #{tpu_custom_call.1} parent=11 // pred_check_branch
          %105 = sbr.rel (%p103) target = $region16
        $region15: #{tpu_custom_call.1} parent=11 // pred_region
          %s107 = ssub.s32 9216, 9216
          %108 = vsyncadd [#allocation6], %s107
          %s109 = sshll.u32 [#allocation5], 4
          %s110 = int_to_ptr.vmem [resolvable:$true] %s109
          %115 = dma.hbm_to_vmem [thread:$0]  %s1, 9216, %s110, [#allocation6], 192, 192, 12
        $region16: #{tpu_custom_call.1} parent=11 // pred_fallthru
          _
      $region12: #{tpu_custom_call.1} parent=5 // pred_fallthru
        _
      %p116 = scmp.lt.s32.totalorder %s15, 2
      // Predicated region
      $region17: #{tpu_custom_call.1} parent=5 // pred_check
        %p117 = pneg %p116
      $region18: #{tpu_custom_call.1} parent=5 // pred_check_branch
        %119 = sbr.rel (%p117) target = $region20
      $region19: #{tpu_custom_call.1} parent=5 // pred_region
        // Predicated region
        $region21: #{tpu_custom_call.1} parent=19 // pred_check
          %p120 = pneg %p35
        $region22: #{tpu_custom_call.1} parent=19 // pred_check_branch
          %122 = sbr.rel (%p120) target = $region24
        $region23: #{tpu_custom_call.1} parent=19 // pred_region
          %s123 = sand.u32 %s25, 1
          %s124 = scalar_lea.sflag [#allocation3], %s123
          %s125 = sand.u32 %s25, 1
          %s126 = smul.addr %s125, 384
          %s127 = scalar_lea.vmem [#allocation2], %s126
          %s129 = ssub.s32 6144, 6144
          %130 = vsyncadd %s124, %s129
          %s131 = smul.addr %s15, 48
          %s132 = smul.addr %s131, 128
          %s133 = scalar_lea.hbm %s0, %s132
          %s134 = sshll.u32 %s127, 4
          %s135 = int_to_ptr.vmem [resolvable:$true] %s134
          %140 = dma.hbm_to_vmem [thread:$0]  %s133, 6144, %s135, %s124, 384, 384, 24
        $region24: #{tpu_custom_call.1} parent=19 // pred_fallthru
          _
      $region20: #{tpu_custom_call.1} parent=5 // pred_fallthru
        _
      %p141 = scmp.le.s32.totalorder 1, %s15
      %p142 = scmp.lt.s32.totalorder %s15, 3
      %p143 = pnand %p141, %p142
      %p144 = pneg %p143
      // Predicated region
      $region25: #{tpu_custom_call.1} parent=5 // pred_check
        _
      $region26: #{tpu_custom_call.1} parent=5 // pred_check_branch
        %146 = sbr.rel (%p143) target = $region28
      $region27: #{tpu_custom_call.1} parent=5 // pred_region
        %s147 = ssub.s32 %s15, 1
        %s148 = sand.u32 %s28, 1
        %s149 = scalar_lea.sflag [#allocation3], %s148
        %s150 = sand.u32 %s28, 1
        %s151 = smul.addr %s150, 384
        %s152 = scalar_lea.vmem [#allocation2], %s151
        // Predicated region
        $region29: #{tpu_custom_call.1} parent=27 // pred_check
          %p153 = pneg %p41
        $region30: #{tpu_custom_call.1} parent=27 // pred_check_branch
          %155 = sbr.rel (%p153) target = $region32
        $region31: #{tpu_custom_call.1} parent=27 // pred_region
          %156 = dma.done %s149, 6144
        $region32: #{tpu_custom_call.1} parent=27 // pred_fallthru
          _
        // Predicated region
        $region33: #{tpu_custom_call.1} parent=27 // pred_check
          %p157 = pneg %p62
        $region34: #{tpu_custom_call.1} parent=27 // pred_check_branch
          %159 = sbr.rel (%p157) target = $region36
        $region35: #{tpu_custom_call.1} parent=27 // pred_region
          %160 = dma.done [#allocation6], 9216
        $region36: #{tpu_custom_call.1} parent=27 // pred_fallthru
          _
        %s161 = sand.u32 %s28, 1
        %s162 = scalar_lea.sflag [#allocation3], %s161
        %s163 = sand.u32 %s28, 1
        %s164 = smul.addr %s163, 384
        %s165 = scalar_lea.vmem [#allocation2], %s164
        %p166 = pneg %p41
        %p167 = pneg %p38
        %p168 = pneg %p62
        %p169 = pneg %p59
        %p170 = pneg %p88
        %p171 = pneg %p85
        %s172 = sand.u32 %s75, 1
        %s173 = scalar_lea.sflag [#allocation4], %s172
        %s174 = sand.u32 %s75, 1
        %s175 = smul.addr %s174, 128
        %s176 = scalar_lea.vmem [#allocation7], %s175
        %v178 = vld [vmem:[%s152] sm:$0xff]
        %v179 = vld [vmem:[%s152 + $0x8] sm:$0xff]
        %v180 = vld [vmem:[%s152 + $0x10] sm:$0xff]
        %v181 = vld [vmem:[%s152 + $0x18] sm:$0xff]
        %v182 = vld [vmem:[%s152 + $0x20] sm:$0xff]
        %v183 = vld [vmem:[%s152 + $0x28] sm:$0xff]
        %v184 = vld [vmem:[%s152 + $0x30] sm:$0xff]
        %v185 = vld [vmem:[%s152 + $0x38] sm:$0xff]
        %v186 = vld [vmem:[%s152 + $0x40] sm:$0xff]
        %v187 = vld [vmem:[%s152 + $0x48] sm:$0xff]
        %v188 = vld [vmem:[%s152 + $0x50] sm:$0xff]
        %v189 = vld [vmem:[%s152 + $0x58] sm:$0xff]
        %v190 = vld [vmem:[%s152 + $0x60] sm:$0xff]
        %v191 = vld [vmem:[%s152 + $0x68] sm:$0xff]
        %v192 = vld [vmem:[%s152 + $0x70] sm:$0xff]
        %v193 = vld [vmem:[%s152 + $0x78] sm:$0xff]
        %v194 = vld [vmem:[%s152 + $0x80] sm:$0xff]
        %v195 = vld [vmem:[%s152 + $0x88] sm:$0xff]
        %v196 = vld [vmem:[%s152 + $0x90] sm:$0xff]
        %v197 = vld [vmem:[%s152 + $0x98] sm:$0xff]
        %v198 = vld [vmem:[%s152 + $0xa0] sm:$0xff]
        %v199 = vld [vmem:[%s152 + $0xa8] sm:$0xff]
        %v200 = vld [vmem:[%s152 + $0xb0] sm:$0xff]
        %v201 = vld [vmem:[%s152 + $0xb8] sm:$0xff]
        %v202 = vld [vmem:[%s152 + $0xc0] sm:$0xff]
        %v203 = vld [vmem:[%s152 + $0xc8] sm:$0xff]
        %v204 = vld [vmem:[%s152 + $0xd0] sm:$0xff]
        %v205 = vld [vmem:[%s152 + $0xd8] sm:$0xff]
        %v206 = vld [vmem:[%s152 + $0xe0] sm:$0xff]
        %v207 = vld [vmem:[%s152 + $0xe8] sm:$0xff]
        %v208 = vld [vmem:[%s152 + $0xf0] sm:$0xff]
        %v209 = vld [vmem:[%s152 + $0xf8] sm:$0xff]
        %v210 = vld [vmem:[%s152 + $0x100] sm:$0xff]
        %v211 = vld [vmem:[%s152 + $0x108] sm:$0xff]
        %v212 = vld [vmem:[%s152 + $0x110] sm:$0xff]
        %v213 = vld [vmem:[%s152 + $0x118] sm:$0xff]
        %v214 = vld [vmem:[%s152 + $0x120] sm:$0xff]
        %v215 = vld [vmem:[%s152 + $0x128] sm:$0xff]
        %v216 = vld [vmem:[%s152 + $0x130] sm:$0xff]
        %v217 = vld [vmem:[%s152 + $0x138] sm:$0xff]
        %v218 = vld [vmem:[%s152 + $0x140] sm:$0xff]
        %v219 = vld [vmem:[%s152 + $0x148] sm:$0xff]
        %v220 = vld [vmem:[%s152 + $0x150] sm:$0xff]
        %v221 = vld [vmem:[%s152 + $0x158] sm:$0xff]
        %v222 = vld [vmem:[%s152 + $0x160] sm:$0xff]
        %v223 = vld [vmem:[%s152 + $0x168] sm:$0xff]
        %v224 = vld [vmem:[%s152 + $0x170] sm:$0xff]
        %v225 = vld [vmem:[%s152 + $0x178] sm:$0xff]
        %v226 = vpack.c.bf16 %v181, %v178
        %v227 = vpack.c.bf16 %v182, %v179
        %v228 = vpack.c.bf16 %v183, %v180
        %v229 = vpack.c.bf16 %v187, %v184
        %v230 = vpack.c.bf16 %v188, %v185
        %v231 = vpack.c.bf16 %v189, %v186
        %v232 = vpack.c.bf16 %v193, %v190
        %v233 = vpack.c.bf16 %v194, %v191
        %v234 = vpack.c.bf16 %v195, %v192
        %v235 = vpack.c.bf16 %v199, %v196
        %v236 = vpack.c.bf16 %v200, %v197
        %v237 = vpack.c.bf16 %v201, %v198
        %v238 = vpack.c.bf16 %v205, %v202
        %v239 = vpack.c.bf16 %v206, %v203
        %v240 = vpack.c.bf16 %v207, %v204
        %v241 = vpack.c.bf16 %v211, %v208
        %v242 = vpack.c.bf16 %v212, %v209
        %v243 = vpack.c.bf16 %v213, %v210
        %v244 = vpack.c.bf16 %v217, %v214
        %v245 = vpack.c.bf16 %v218, %v215
        %v246 = vpack.c.bf16 %v219, %v216
        %v247 = vpack.c.bf16 %v223, %v220
        %v248 = vpack.c.bf16 %v224, %v221
        %v249 = vpack.c.bf16 %v225, %v222
        %v250 = vld [vmem:[#allocation5] sm:$0xff]
        %v251 = vld [vmem:[#allocation5 + $0x8] sm:$0xf]
        %v252 = vld [vmem:[#allocation5 + $0xc] sm:$0xff]
        %v253 = vld [vmem:[#allocation5 + $0x14] sm:$0xf]
        %v254 = vld [vmem:[#allocation5 + $0x18] sm:$0xff]
        %v255 = vld [vmem:[#allocation5 + $0x20] sm:$0xf]
        %v256 = vld [vmem:[#allocation5 + $0x24] sm:$0xff]
        %v257 = vld [vmem:[#allocation5 + $0x2c] sm:$0xf]
        %v258 = vld [vmem:[#allocation5 + $0x30] sm:$0xff]
        %v259 = vld [vmem:[#allocation5 + $0x38] sm:$0xf]
        %v260 = vld [vmem:[#allocation5 + $0x3c] sm:$0xff]
        %v261 = vld [vmem:[#allocation5 + $0x44] sm:$0xf]
        %v262 = vld [vmem:[#allocation5 + $0x48] sm:$0xff]
        %v263 = vld [vmem:[#allocation5 + $0x50] sm:$0xf]
        %v264 = vld [vmem:[#allocation5 + $0x54] sm:$0xff]
        %v265 = vld [vmem:[#allocation5 + $0x5c] sm:$0xf]
        %v266 = vld [vmem:[#allocation5 + $0x60] sm:$0xff]
        %v267 = vld [vmem:[#allocation5 + $0x68] sm:$0xf]
        %v268 = vld [vmem:[#allocation5 + $0x6c] sm:$0xff]
        %v269 = vld [vmem:[#allocation5 + $0x74] sm:$0xf]
        %v270 = vld [vmem:[#allocation5 + $0x78] sm:$0xff]
        %v271 = vld [vmem:[#allocation5 + $0x80] sm:$0xf]
        %v272 = vld [vmem:[#allocation5 + $0x84] sm:$0xff]
        %v273 = vld [vmem:[#allocation5 + $0x8c] sm:$0xf]
        %v274 = vld [vmem:[#allocation5 + $0x90] sm:$0xff]
        %v275 = vld [vmem:[#allocation5 + $0x98] sm:$0xf]
        %v276 = vld [vmem:[#allocation5 + $0x9c] sm:$0xff]
        %v277 = vld [vmem:[#allocation5 + $0xa4] sm:$0xf]
        %v278 = vld [vmem:[#allocation5 + $0xa8] sm:$0xff]
        %v279 = vld [vmem:[#allocation5 + $0xb0] sm:$0xf]
        %v280 = vld [vmem:[#allocation5 + $0xb4] sm:$0xff]
        %v281 = vld [vmem:[#allocation5 + $0xbc] sm:$0xf]
        %v282 = vld [vmem:[#allocation5 + $0xc0] sm:$0xff]
        %v283 = vld [vmem:[#allocation5 + $0xc8] sm:$0xf]
        %v284 = vld [vmem:[#allocation5 + $0xcc] sm:$0xff]
        %v285 = vld [vmem:[#allocation5 + $0xd4] sm:$0xf]
        %v286 = vld [vmem:[#allocation5 + $0xd8] sm:$0xff]
        %v287 = vld [vmem:[#allocation5 + $0xe0] sm:$0xf]
        %v288 = vld [vmem:[#allocation5 + $0xe4] sm:$0xff]
        %v289 = vld [vmem:[#allocation5 + $0xec] sm:$0xf]
        %v290 = vld [vmem:[#allocation5 + $0xf0] sm:$0xff]
        %v291 = vld [vmem:[#allocation5 + $0xf8] sm:$0xf]
        %v292 = vld [vmem:[#allocation5 + $0xfc] sm:$0xff]
        %v293 = vld [vmem:[#allocation5 + $0x104] sm:$0xf]
        %v294 = vld [vmem:[#allocation5 + $0x108] sm:$0xff]
        %v295 = vld [vmem:[#allocation5 + $0x110] sm:$0xf]
        %v296 = vld [vmem:[#allocation5 + $0x114] sm:$0xff]
        %v297 = vld [vmem:[#allocation5 + $0x11c] sm:$0xf]
        %v298 = vld [vmem:[#allocation5 + $0x120] sm:$0xff]
        %v299 = vld [vmem:[#allocation5 + $0x128] sm:$0xf]
        %v300 = vld [vmem:[#allocation5 + $0x12c] sm:$0xff]
        %v301 = vld [vmem:[#allocation5 + $0x134] sm:$0xf]
        %v302 = vld [vmem:[#allocation5 + $0x138] sm:$0xff]
        %v303 = vld [vmem:[#allocation5 + $0x140] sm:$0xf]
        %v304 = vld [vmem:[#allocation5 + $0x144] sm:$0xff]
        %v305 = vld [vmem:[#allocation5 + $0x14c] sm:$0xf]
        %v306 = vld [vmem:[#allocation5 + $0x150] sm:$0xff]
        %v307 = vld [vmem:[#allocation5 + $0x158] sm:$0xf]
        %v308 = vld [vmem:[#allocation5 + $0x15c] sm:$0xff]
        %v309 = vld [vmem:[#allocation5 + $0x164] sm:$0xf]
        %v310 = vld [vmem:[#allocation5 + $0x168] sm:$0xff]
        %v311 = vld [vmem:[#allocation5 + $0x170] sm:$0xf]
        %v312 = vld [vmem:[#allocation5 + $0x174] sm:$0xff]
        %v313 = vld [vmem:[#allocation5 + $0x17c] sm:$0xf]
        %v314 = vld [vmem:[#allocation5 + $0x180] sm:$0xff]
        %v315 = vld [vmem:[#allocation5 + $0x188] sm:$0xf]
        %v316 = vld [vmem:[#allocation5 + $0x18c] sm:$0xff]
        %v317 = vld [vmem:[#allocation5 + $0x194] sm:$0xf]
        %v318 = vld [vmem:[#allocation5 + $0x198] sm:$0xff]
        %v319 = vld [vmem:[#allocation5 + $0x1a0] sm:$0xf]
        %v320 = vld [vmem:[#allocation5 + $0x1a4] sm:$0xff]
        %v321 = vld [vmem:[#allocation5 + $0x1ac] sm:$0xf]
        %v322 = vld [vmem:[#allocation5 + $0x1b0] sm:$0xff]
        %v323 = vld [vmem:[#allocation5 + $0x1b8] sm:$0xf]
        %v324 = vld [vmem:[#allocation5 + $0x1bc] sm:$0xff]
        %v325 = vld [vmem:[#allocation5 + $0x1c4] sm:$0xf]
        %v326 = vld [vmem:[#allocation5 + $0x1c8] sm:$0xff]
        %v327 = vld [vmem:[#allocation5 + $0x1d0] sm:$0xf]
        %v328 = vld [vmem:[#allocation5 + $0x1d4] sm:$0xff]
        %v329 = vld [vmem:[#allocation5 + $0x1dc] sm:$0xf]
        %v330 = vld [vmem:[#allocation5 + $0x1e0] sm:$0xff]
        %v331 = vld [vmem:[#allocation5 + $0x1e8] sm:$0xf]
        %v332 = vld [vmem:[#allocation5 + $0x1ec] sm:$0xff]
        %v333 = vld [vmem:[#allocation5 + $0x1f4] sm:$0xf]
        %v334 = vld [vmem:[#allocation5 + $0x1f8] sm:$0xff]
        %v335 = vld [vmem:[#allocation5 + $0x200] sm:$0xf]
        %v336 = vld [vmem:[#allocation5 + $0x204] sm:$0xff]
        %v337 = vld [vmem:[#allocation5 + $0x20c] sm:$0xf]
        %v338 = vld [vmem:[#allocation5 + $0x210] sm:$0xff]
        %v339 = vld [vmem:[#allocation5 + $0x218] sm:$0xf]
        %v340 = vld [vmem:[#allocation5 + $0x21c] sm:$0xff]
        %v341 = vld [vmem:[#allocation5 + $0x224] sm:$0xf]
        %v342 = vld [vmem:[#allocation5 + $0x228] sm:$0xff]
        %v343 = vld [vmem:[#allocation5 + $0x230] sm:$0xf]
        %v344 = vld [vmem:[#allocation5 + $0x234] sm:$0xff]
        %v345 = vld [vmem:[#allocation5 + $0x23c] sm:$0xf]
        %v442 = vunpack.c.l.b16 %v250
        %v443 = vunpack.c.h.b16 %v250
        %v444 = vunpack.c.l.b16 %v251
        %v445 = vunpack.c.l.b16 %v252
        %v446 = vunpack.c.h.b16 %v252
        %v447 = vunpack.c.l.b16 %v253
        %v448 = vunpack.c.l.b16 %v254
        %v449 = vunpack.c.h.b16 %v254
        %v450 = vunpack.c.l.b16 %v255
        %v451 = vunpack.c.l.b16 %v256
        %v452 = vunpack.c.h.b16 %v256
        %v453 = vunpack.c.l.b16 %v257
        %v454 = vunpack.c.l.b16 %v258
        %v455 = vunpack.c.h.b16 %v258
        %v456 = vunpack.c.l.b16 %v259
        %v457 = vunpack.c.l.b16 %v260
        %v458 = vunpack.c.h.b16 %v260
        %v459 = vunpack.c.l.b16 %v261
        %v460 = vunpack.c.l.b16 %v262
        %v461 = vunpack.c.h.b16 %v262
        %v462 = vunpack.c.l.b16 %v263
        %v463 = vunpack.c.l.b16 %v264
        %v464 = vunpack.c.h.b16 %v264
        %v465 = vunpack.c.l.b16 %v265
        %v466 = vunpack.c.l.b16 %v266
        %v467 = vunpack.c.h.b16 %v266
        %v468 = vunpack.c.l.b16 %v267
        %v469 = vunpack.c.l.b16 %v268
        %v470 = vunpack.c.h.b16 %v268
        %v471 = vunpack.c.l.b16 %v269
        %v472 = vunpack.c.l.b16 %v270
        %v473 = vunpack.c.h.b16 %v270
        %v474 = vunpack.c.l.b16 %v271
        %v475 = vunpack.c.l.b16 %v272
        %v476 = vunpack.c.h.b16 %v272
        %v477 = vunpack.c.l.b16 %v273
        %v478 = vunpack.c.l.b16 %v274
        %v479 = vunpack.c.h.b16 %v274
        %v480 = vunpack.c.l.b16 %v275
        %v481 = vunpack.c.l.b16 %v276
        %v482 = vunpack.c.h.b16 %v276
        %v483 = vunpack.c.l.b16 %v277
        %v484 = vunpack.c.l.b16 %v278
        %v485 = vunpack.c.h.b16 %v278
        %v486 = vunpack.c.l.b16 %v279
        %v487 = vunpack.c.l.b16 %v280
        %v488 = vunpack.c.h.b16 %v280
        %v489 = vunpack.c.l.b16 %v281
        %v490 = vunpack.c.l.b16 %v282
        %v491 = vunpack.c.h.b16 %v282
        %v492 = vunpack.c.l.b16 %v283
        %v493 = vunpack.c.l.b16 %v284
        %v494 = vunpack.c.h.b16 %v284
        %v495 = vunpack.c.l.b16 %v285
        %v496 = vunpack.c.l.b16 %v286
        %v497 = vunpack.c.h.b16 %v286
        %v498 = vunpack.c.l.b16 %v287
        %v499 = vunpack.c.l.b16 %v288
        %v500 = vunpack.c.h.b16 %v288
        %v501 = vunpack.c.l.b16 %v289
        %v502 = vunpack.c.l.b16 %v290
        %v503 = vunpack.c.h.b16 %v290
        %v504 = vunpack.c.l.b16 %v291
        %v505 = vunpack.c.l.b16 %v292
        %v506 = vunpack.c.h.b16 %v292
        %v507 = vunpack.c.l.b16 %v293
        %v508 = vunpack.c.l.b16 %v294
        %v509 = vunpack.c.h.b16 %v294
        %v510 = vunpack.c.l.b16 %v295
        %v511 = vunpack.c.l.b16 %v296
        %v512 = vunpack.c.h.b16 %v296
        %v513 = vunpack.c.l.b16 %v297
        %v514 = vunpack.c.l.b16 %v298
        %v515 = vunpack.c.h.b16 %v298
        %v516 = vunpack.c.l.b16 %v299
        %v517 = vunpack.c.l.b16 %v300
        %v518 = vunpack.c.h.b16 %v300
        %v519 = vunpack.c.l.b16 %v301
        %v520 = vunpack.c.l.b16 %v302
        %v521 = vunpack.c.h.b16 %v302
        %v522 = vunpack.c.l.b16 %v303
        %v523 = vunpack.c.l.b16 %v304
        %v524 = vunpack.c.h.b16 %v304
        %v525 = vunpack.c.l.b16 %v305
        %v526 = vunpack.c.l.b16 %v306
        %v527 = vunpack.c.h.b16 %v306
        %v528 = vunpack.c.l.b16 %v307
        %v529 = vunpack.c.l.b16 %v308
        %v530 = vunpack.c.h.b16 %v308
        %v531 = vunpack.c.l.b16 %v309
        %v532 = vunpack.c.l.b16 %v310
        %v533 = vunpack.c.h.b16 %v310
        %v534 = vunpack.c.l.b16 %v311
        %v535 = vunpack.c.l.b16 %v312
        %v536 = vunpack.c.h.b16 %v312
        %v537 = vunpack.c.l.b16 %v313
        %v538 = vunpack.c.l.b16 %v314
        %v539 = vunpack.c.h.b16 %v314
        %v540 = vunpack.c.l.b16 %v315
        %v541 = vunpack.c.l.b16 %v316
        %v542 = vunpack.c.h.b16 %v316
        %v543 = vunpack.c.l.b16 %v317
        %v544 = vunpack.c.l.b16 %v318
        %v545 = vunpack.c.h.b16 %v318
        %v546 = vunpack.c.l.b16 %v319
        %v547 = vunpack.c.l.b16 %v320
        %v548 = vunpack.c.h.b16 %v320
        %v549 = vunpack.c.l.b16 %v321
        %v550 = vunpack.c.l.b16 %v322
        %v551 = vunpack.c.h.b16 %v322
        %v552 = vunpack.c.l.b16 %v323
        %v553 = vunpack.c.l.b16 %v324
        %v554 = vunpack.c.h.b16 %v324
        %v555 = vunpack.c.l.b16 %v325
        %v556 = vunpack.c.l.b16 %v326
        %v557 = vunpack.c.h.b16 %v326
        %v558 = vunpack.c.l.b16 %v327
        %v559 = vunpack.c.l.b16 %v328
        %v560 = vunpack.c.h.b16 %v328
        %v561 = vunpack.c.l.b16 %v329
        %v562 = vunpack.c.l.b16 %v330
        %v563 = vunpack.c.h.b16 %v330
        %v564 = vunpack.c.l.b16 %v331
        %v565 = vunpack.c.l.b16 %v332
        %v566 = vunpack.c.h.b16 %v332
        %v567 = vunpack.c.l.b16 %v333
        %v568 = vunpack.c.l.b16 %v334
        %v569 = vunpack.c.h.b16 %v334
        %v570 = vunpack.c.l.b16 %v335
        %v571 = vunpack.c.l.b16 %v336
        %v572 = vunpack.c.h.b16 %v336
        %v573 = vunpack.c.l.b16 %v337
        %v574 = vunpack.c.l.b16 %v338
        %v575 = vunpack.c.h.b16 %v338
        %v576 = vunpack.c.l.b16 %v339
        %v577 = vunpack.c.l.b16 %v340
        %v578 = vunpack.c.h.b16 %v340
        %v579 = vunpack.c.l.b16 %v341
        %v580 = vunpack.c.l.b16 %v342
        %v581 = vunpack.c.h.b16 %v342
        %v582 = vunpack.c.l.b16 %v343
        %v583 = vunpack.c.l.b16 %v344
        %v584 = vunpack.c.h.b16 %v344
        %v585 = vunpack.c.l.b16 %v345
        %v586 = vpack.c.b16 %v445, %v442
        %v587 = vpack.c.b16 %v446, %v443
        %v588 = vpack.c.b16 %v447, %v444
        %v589 = vpack.c.b16 %v451, %v448
        %v590 = vpack.c.b16 %v452, %v449
        %v591 = vpack.c.b16 %v453, %v450
        %v592 = vpack.c.b16 %v457, %v454
        %v593 = vpack.c.b16 %v458, %v455
        %v594 = vpack.c.b16 %v459, %v456
        %v595 = vpack.c.b16 %v463, %v460
        %v596 = vpack.c.b16 %v464, %v461
        %v597 = vpack.c.b16 %v465, %v462
        %v598 = vpack.c.b16 %v469, %v466
        %v599 = vpack.c.b16 %v470, %v467
        %v600 = vpack.c.b16 %v471, %v468
        %v601 = vpack.c.b16 %v475, %v472
        %v602 = vpack.c.b16 %v476, %v473
        %v603 = vpack.c.b16 %v477, %v474
        %v604 = vpack.c.b16 %v481, %v478
        %v605 = vpack.c.b16 %v482, %v479
        %v606 = vpack.c.b16 %v483, %v480
        %v607 = vpack.c.b16 %v487, %v484
        %v608 = vpack.c.b16 %v488, %v485
        %v609 = vpack.c.b16 %v489, %v486
        %v610 = vpack.c.b16 %v493, %v490
        %v611 = vpack.c.b16 %v494, %v491
        %v612 = vpack.c.b16 %v495, %v492
        %v613 = vpack.c.b16 %v499, %v496
        %v614 = vpack.c.b16 %v500, %v497
        %v615 = vpack.c.b16 %v501, %v498
        %v616 = vpack.c.b16 %v505, %v502
        %v617 = vpack.c.b16 %v506, %v503
        %v618 = vpack.c.b16 %v507, %v504
        %v619 = vpack.c.b16 %v511, %v508
        %v620 = vpack.c.b16 %v512, %v509
        %v621 = vpack.c.b16 %v513, %v510
        %v622 = vpack.c.b16 %v517, %v514
        %v623 = vpack.c.b16 %v518, %v515
        %v624 = vpack.c.b16 %v519, %v516
        %v625 = vpack.c.b16 %v523, %v520
        %v626 = vpack.c.b16 %v524, %v521
        %v627 = vpack.c.b16 %v525, %v522
        %v628 = vpack.c.b16 %v529, %v526
        %v629 = vpack.c.b16 %v530, %v527
        %v630 = vpack.c.b16 %v531, %v528
        %v631 = vpack.c.b16 %v535, %v532
        %v632 = vpack.c.b16 %v536, %v533
        %v633 = vpack.c.b16 %v537, %v534
        %v634 = vpack.c.b16 %v541, %v538
        %v635 = vpack.c.b16 %v542, %v539
        %v636 = vpack.c.b16 %v543, %v540
        %v637 = vpack.c.b16 %v547, %v544
        %v638 = vpack.c.b16 %v548, %v545
        %v639 = vpack.c.b16 %v549, %v546
        %v640 = vpack.c.b16 %v553, %v550
        %v641 = vpack.c.b16 %v554, %v551
        %v642 = vpack.c.b16 %v555, %v552
        %v643 = vpack.c.b16 %v559, %v556
        %v644 = vpack.c.b16 %v560, %v557
        %v645 = vpack.c.b16 %v561, %v558
        %v646 = vpack.c.b16 %v565, %v562
        %v647 = vpack.c.b16 %v566, %v563
        %v648 = vpack.c.b16 %v567, %v564
        %v649 = vpack.c.b16 %v571, %v568
        %v650 = vpack.c.b16 %v572, %v569
        %v651 = vpack.c.b16 %v573, %v570
        %v652 = vpack.c.b16 %v577, %v574
        %v653 = vpack.c.b16 %v578, %v575
        %v654 = vpack.c.b16 %v579, %v576
        %v655 = vpack.c.b16 %v583, %v580
        %v656 = vpack.c.b16 %v584, %v581
        %v657 = vpack.c.b16 %v585, %v582
        %730 = vmatprep.subr.bf16.mxu0 %v587
        %731 = vmatpush1.bf16.msra.mxu0 %v586
        %732 = vmatprep.subr.bf16.mxu0 %v590
        %733 = vmatpush1.bf16.msra.mxu0 %v589
        %734 = vmatprep.subr.bf16.mxu0 %v593
        %735 = vmatpush1.bf16.msra.mxu0 %v592
        %736 = vmatprep.subr.bf16.mxu0 %v596
        %737 = vmatpush1.bf16.msra.mxu0 %v595
        %738 = vmatprep.subr.bf16.mxu0 %v599
        %739 = vmatpush1.bf16.msra.mxu0 %v598
        %740 = vmatprep.subr.bf16.mxu0 %v602
        %741 = vmatpush1.bf16.msra.mxu0 %v601
        %742 = vmatprep.subr.bf16.mxu0 %v605
        %743 = vmatpush1.bf16.msra.mxu0 %v604
        %744 = vmatprep.subr.bf16.mxu0 %v608
        %745 = vmatpush1.bf16.msra.mxu0 %v607
        %746 = vmatprep.subr.bf16.mxu0 %v611
        %747 = vmatpush1.bf16.msra.mxu0 %v610
        %748 = vmatprep.subr.bf16.mxu0 %v614
        %749 = vmatpush1.bf16.msra.mxu0 %v613
        %750 = vmatprep.subr.bf16.mxu0 %v617
        %751 = vmatpush1.bf16.msra.mxu0 %v616
        %752 = vmatprep.subr.bf16.mxu0 %v620
        %753 = vmatpush1.bf16.msra.mxu0 %v619
        %754 = vmatprep.subr.bf16.mxu0 %v623
        %755 = vmatpush1.bf16.msra.mxu0 %v622
        %756 = vmatprep.subr.bf16.mxu0 %v626
        %757 = vmatpush1.bf16.msra.mxu0 %v625
        %758 = vmatprep.subr.bf16.mxu0 %v629
        %759 = vmatpush1.bf16.msra.mxu0 %v628
        %760 = vmatprep.subr.bf16.mxu0 %v632
        %761 = vmatpush1.bf16.msra.mxu0 %v631
        %762 = vmatprep.mubr.bf16.mxu0 %v227
        %763 = vmatmul.mubr.bf16.gmra.mrb[0].mxu0 %v226
        %v764 = vpop.f32.mrb[0].mxu0
        %v765 = vadd.f32 0.0, %v764
        %v766 = vpop.f32.mrb[0].mxu0
        %v767 = vadd.f32 0.0, %v766
        %v768 = vpop.f32.mrb[0].mxu0
        %v769 = vadd.f32 0.0, %v768
        %v770 = vpop.f32.mrb[0].mxu0
        %v771 = vadd.f32 0.0, %v770
        %772 = vmatprep.mubr.bf16.mxu0 %v230
        %773 = vmatmul.mubr.bf16.gmra.mrb[0].mxu0 %v229
        %v774 = vpop.f32.mrb[0].mxu0
        %v775 = vadd.f32 0.0, %v774
        %v776 = vpop.f32.mrb[0].mxu0
        %v777 = vadd.f32 0.0, %v776
        %v778 = vpop.f32.mrb[0].mxu0
        %v779 = vadd.f32 0.0, %v778
        %v780 = vpop.f32.mrb[0].mxu0
        %v781 = vadd.f32 0.0, %v780
        %782 = vmatprep.mubr.bf16.mxu0 %v233
        %783 = vmatmul.mubr.bf16.gmra.mrb[0].mxu0 %v232
        %v784 = vpop.f32.mrb[0].mxu0
        %v785 = vadd.f32 0.0, %v784
        %v786 = vpop.f32.mrb[0].mxu0
        %v787 = vadd.f32 0.0, %v786
        %v788 = vpop.f32.mrb[0].mxu0
        %v789 = vadd.f32 0.0, %v788
        %v790 = vpop.f32.mrb[0].mxu0
        %v791 = vadd.f32 0.0, %v790
        %792 = vmatprep.mubr.bf16.mxu0 %v236
        %793 = vmatmul.mubr.bf16.gmra.mrb[0].mxu0 %v235
        %v794 = vpop.f32.mrb[0].mxu0
        %v795 = vadd.f32 0.0, %v794
        %v796 = vpop.f32.mrb[0].mxu0
        %v797 = vadd.f32 0.0, %v796
        %v798 = vpop.f32.mrb[0].mxu0
        %v799 = vadd.f32 0.0, %v798
        %v800 = vpop.f32.mrb[0].mxu0
        %v801 = vadd.f32 0.0, %v800
        %802 = vmatprep.mubr.bf16.mxu0 %v239
        %803 = vmatmul.mubr.bf16.gmra.mrb[0].mxu0 %v238
        %v804 = vpop.f32.mrb[0].mxu0
        %v805 = vadd.f32 0.0, %v804
        %v806 = vpop.f32.mrb[0].mxu0
        %v807 = vadd.f32 0.0, %v806
        %v808 = vpop.f32.mrb[0].mxu0
        %v809 = vadd.f32 0.0, %v808
        %v810 = vpop.f32.mrb[0].mxu0
        %v811 = vadd.f32 0.0, %v810
        %812 = vmatprep.mubr.bf16.mxu0 %v242
        %813 = vmatmul.mubr.bf16.gmra.mrb[0].mxu0 %v241
        %v814 = vpop.f32.mrb[0].mxu0
        %v815 = vadd.f32 0.0, %v814
        %v816 = vpop.f32.mrb[0].mxu0
        %v817 = vadd.f32 0.0, %v816
        %v818 = vpop.f32.mrb[0].mxu0
        %v819 = vadd.f32 0.0, %v818
        %v820 = vpop.f32.mrb[0].mxu0
        %v821 = vadd.f32 0.0, %v820
        %822 = vmatprep.mubr.bf16.mxu0 %v245
        %823 = vmatmul.mubr.bf16.gmra.mrb[0].mxu0 %v244
        %v824 = vpop.f32.mrb[0].mxu0
        %v825 = vadd.f32 0.0, %v824
        %v826 = vpop.f32.mrb[0].mxu0
        %v827 = vadd.f32 0.0, %v826
        %v828 = vpop.f32.mrb[0].mxu0
        %v829 = vadd.f32 0.0, %v828
        %v830 = vpop.f32.mrb[0].mxu0
        %v831 = vadd.f32 0.0, %v830
        %832 = vmatprep.mubr.bf16.mxu0 %v248
        %833 = vmatmul.mubr.bf16.gmra.mrb[0].mxu0 %v247
        %v834 = vpop.f32.mrb[0].mxu0
        %v835 = vadd.f32 0.0, %v834
        %v836 = vpop.f32.mrb[0].mxu0
        %v837 = vadd.f32 0.0, %v836
        %v838 = vpop.f32.mrb[0].mxu0
        %v839 = vadd.f32 0.0, %v838
        %v840 = vpop.f32.mrb[0].mxu0
        %v841 = vadd.f32 0.0, %v840
        %842 = vdwg.mxu0
        %843 = vmatprep.subr.bf16.mxu0 %v635
        %844 = vmatpush1.bf16.msra.mxu0 %v634
        %845 = vmatprep.subr.bf16.mxu0 %v638
        %846 = vmatpush1.bf16.msra.mxu0 %v637
        %847 = vmatprep.subr.bf16.mxu0 %v641
        %848 = vmatpush1.bf16.msra.mxu0 %v640
        %849 = vmatprep.subr.bf16.mxu0 %v644
        %850 = vmatpush1.bf16.msra.mxu0 %v643
        %851 = vmatprep.subr.bf16.mxu0 %v647
        %852 = vmatpush1.bf16.msra.mxu0 %v646
        %853 = vmatprep.subr.bf16.mxu0 %v650
        %854 = vmatpush1.bf16.msra.mxu0 %v649
        %855 = vmatprep.subr.bf16.mxu0 %v653
        %856 = vmatpush1.bf16.msra.mxu0 %v652
        %857 = vmatprep.subr.bf16.mxu0 %v656
        %858 = vmatpush1.bf16.msra.mxu0 %v655
        %859 = vmatprep.subr.bf16.mxu0 0
        %860 = vmatpush1.bf16.msra.mxu0 0
        %861 = vmatprep.subr.bf16.mxu0 0
        %862 = vmatpush1.bf16.msra.mxu0 0
        %863 = vmatprep.subr.bf16.mxu0 0
        %864 = vmatpush1.bf16.msra.mxu0 0
        %865 = vmatprep.subr.bf16.mxu0 0
        %866 = vmatpush1.bf16.msra.mxu0 0
        %867 = vmatprep.subr.bf16.mxu0 0
        %868 = vmatpush1.bf16.msra.mxu0 0
        %869 = vmatprep.subr.bf16.mxu0 0
        %870 = vmatpush1.bf16.msra.mxu0 0
        %871 = vmatprep.subr.bf16.mxu0 0
        %872 = vmatpush1.bf16.msra.mxu0 0
        %873 = vmatprep.subr.bf16.mxu0 0
        %874 = vmatpush1.bf16.msra.mxu0 0
        %875 = vmatprep.mubr.bf16.mxu0 0
        %876 = vmatmul.mubr.bf16.gmra.mrb[0].mxu0 %v228
        %v877 = vpop.f32.mrb[0].mxu0
        %v878 = vadd.f32 %v765, %v877
        %v879 = vpop.f32.mrb[0].mxu0
        %v880 = vadd.f32 %v767, %v879
        %v881 = vpop.f32.mrb[0].mxu0
        %v882 = vadd.f32 %v769, %v881
        %v883 = vpop.f32.mrb[0].mxu0
        %v884 = vadd.f32 %v771, %v883
        %885 = vmatprep.mubr.bf16.mxu0 0
        %886 = vmatmul.mubr.bf16.gmra.mrb[0].mxu0 %v231
        %v887 = vpop.f32.mrb[0].mxu0
        %v888 = vadd.f32 %v775, %v887
        %v889 = vpop.f32.mrb[0].mxu0
        %v890 = vadd.f32 %v777, %v889
        %v891 = vpop.f32.mrb[0].mxu0
        %v892 = vadd.f32 %v779, %v891
        %v893 = vpop.f32.mrb[0].mxu0
        %v894 = vadd.f32 %v781, %v893
        %895 = vmatprep.mubr.bf16.mxu0 0
        %896 = vmatmul.mubr.bf16.gmra.mrb[0].mxu0 %v234
        %v897 = vpop.f32.mrb[0].mxu0
        %v898 = vadd.f32 %v785, %v897
        %v899 = vpop.f32.mrb[0].mxu0
        %v900 = vadd.f32 %v787, %v899
        %v901 = vpop.f32.mrb[0].mxu0
        %v902 = vadd.f32 %v789, %v901
        %v903 = vpop.f32.mrb[0].mxu0
        %v904 = vadd.f32 %v791, %v903
        %905 = vmatprep.mubr.bf16.mxu0 0
        %906 = vmatmul.mubr.bf16.gmra.mrb[0].mxu0 %v237
        %v907 = vpop.f32.mrb[0].mxu0
        %v908 = vadd.f32 %v795, %v907
        %v909 = vpop.f32.mrb[0].mxu0
        %v910 = vadd.f32 %v797, %v909
        %v911 = vpop.f32.mrb[0].mxu0
        %v912 = vadd.f32 %v799, %v911
        %v913 = vpop.f32.mrb[0].mxu0
        %v914 = vadd.f32 %v801, %v913
        %915 = vmatprep.mubr.bf16.mxu0 0
        %916 = vmatmul.mubr.bf16.gmra.mrb[0].mxu0 %v240
        %v917 = vpop.f32.mrb[0].mxu0
        %v918 = vadd.f32 %v805, %v917
        %v919 = vpop.f32.mrb[0].mxu0
        %v920 = vadd.f32 %v807, %v919
        %v921 = vpop.f32.mrb[0].mxu0
        %v922 = vadd.f32 %v809, %v921
        %v923 = vpop.f32.mrb[0].mxu0
        %v924 = vadd.f32 %v811, %v923
        %925 = vmatprep.mubr.bf16.mxu0 0
        %926 = vmatmul.mubr.bf16.gmra.mrb[0].mxu0 %v243
        %v927 = vpop.f32.mrb[0].mxu0
        %v928 = vadd.f32 %v815, %v927
        %v929 = vpop.f32.mrb[0].mxu0
        %v930 = vadd.f32 %v817, %v929
        %v931 = vpop.f32.mrb[0].mxu0
        %v932 = vadd.f32 %v819, %v931
        %v933 = vpop.f32.mrb[0].mxu0
        %v934 = vadd.f32 %v821, %v933
        %935 = vmatprep.mubr.bf16.mxu0 0
        %936 = vmatmul.mubr.bf16.gmra.mrb[0].mxu0 %v246
        %v937 = vpop.f32.mrb[0].mxu0
        %v938 = vadd.f32 %v825, %v937
        %v939 = vpop.f32.mrb[0].mxu0
        %v940 = vadd.f32 %v827, %v939
        %v941 = vpop.f32.mrb[0].mxu0
        %v942 = vadd.f32 %v829, %v941
        %v943 = vpop.f32.mrb[0].mxu0
        %v944 = vadd.f32 %v831, %v943
        %945 = vmatprep.mubr.bf16.mxu0 0
        %946 = vmatmul.mubr.bf16.gmra.mrb[0].mxu0 %v249
        %v947 = vpop.f32.mrb[0].mxu0
        %v948 = vadd.f32 %v835, %v947
        %v949 = vpop.f32.mrb[0].mxu0
        %v950 = vadd.f32 %v837, %v949
        %v951 = vpop.f32.mrb[0].mxu0
        %v952 = vadd.f32 %v839, %v951
        %v953 = vpop.f32.mrb[0].mxu0
        %v954 = vadd.f32 %v841, %v953
        %955 = vdwg.mxu0
        %956 = vmatprep.subr.bf16.mxu0 0
        %957 = vmatpush1.bf16.msra.mxu0 %v588
        %958 = vmatprep.subr.bf16.mxu0 0
        %959 = vmatpush1.bf16.msra.mxu0 %v591
        %960 = vmatprep.subr.bf16.mxu0 0
        %961 = vmatpush1.bf16.msra.mxu0 %v594
        %962 = vmatprep.subr.bf16.mxu0 0
        %963 = vmatpush1.bf16.msra.mxu0 %v597
        %964 = vmatprep.subr.bf16.mxu0 0
        %965 = vmatpush1.bf16.msra.mxu0 %v600
        %966 = vmatprep.subr.bf16.mxu0 0
        %967 = vmatpush1.bf16.msra.mxu0 %v603
        %968 = vmatprep.subr.bf16.mxu0 0
        %969 = vmatpush1.bf16.msra.mxu0 %v606
        %970 = vmatprep.subr.bf16.mxu0 0
        %971 = vmatpush1.bf16.msra.mxu0 %v609
        %972 = vmatprep.subr.bf16.mxu0 0
        %973 = vmatpush1.bf16.msra.mxu0 %v612
        %974 = vmatprep.subr.bf16.mxu0 0
        %975 = vmatpush1.bf16.msra.mxu0 %v615
        %976 = vmatprep.subr.bf16.mxu0 0
        %977 = vmatpush1.bf16.msra.mxu0 %v618
        %978 = vmatprep.subr.bf16.mxu0 0
        %979 = vmatpush1.bf16.msra.mxu0 %v621
        %980 = vmatprep.subr.bf16.mxu0 0
        %981 = vmatpush1.bf16.msra.mxu0 %v624
        %982 = vmatprep.subr.bf16.mxu0 0
        %983 = vmatpush1.bf16.msra.mxu0 %v627
        %984 = vmatprep.subr.bf16.mxu0 0
        %985 = vmatpush1.bf16.msra.mxu0 %v630
        %986 = vmatprep.subr.bf16.mxu0 0
        %987 = vmatpush1.bf16.msra.mxu0 %v633
        %988 = vmatprep.mubr.bf16.mxu0 %v227
        %989 = vmatmul.mubr.bf16.gmra.mrb[0].mxu0 %v226
        %v990 = vpop.f32.mrb[0].mxu0
        %v991 = vadd.f32 0.0, %v990
        %v992 = vpop.f32.mrb[0].mxu0
        %v993 = vpop.f32.mrb[0].mxu0
        %v994 = vadd.f32 0.0, %v993
        %v995 = vpop.f32.mrb[0].mxu0
        %996 = vmatprep.mubr.bf16.mxu0 %v230
        %997 = vmatmul.mubr.bf16.gmra.mrb[0].mxu0 %v229
        %v998 = vpop.f32.mrb[0].mxu0
        %v999 = vadd.f32 0.0, %v998
        %v1000 = vpop.f32.mrb[0].mxu0
        %v1001 = vpop.f32.mrb[0].mxu0
        %v1002 = vadd.f32 0.0, %v1001
        %v1003 = vpop.f32.mrb[0].mxu0
        %1004 = vmatprep.mubr.bf16.mxu0 %v233
        %1005 = vmatmul.mubr.bf16.gmra.mrb[0].mxu0 %v232
        %v1006 = vpop.f32.mrb[0].mxu0
        %v1007 = vadd.f32 0.0, %v1006
        %v1008 = vpop.f32.mrb[0].mxu0
        %v1009 = vpop.f32.mrb[0].mxu0
        %v1010 = vadd.f32 0.0, %v1009
        %v1011 = vpop.f32.mrb[0].mxu0
        %1012 = vmatprep.mubr.bf16.mxu0 %v236
        %1013 = vmatmul.mubr.bf16.gmra.mrb[0].mxu0 %v235
        %v1014 = vpop.f32.mrb[0].mxu0
        %v1015 = vadd.f32 0.0, %v1014
        %v1016 = vpop.f32.mrb[0].mxu0
        %v1017 = vpop.f32.mrb[0].mxu0
        %v1018 = vadd.f32 0.0, %v1017
        %v1019 = vpop.f32.mrb[0].mxu0
        %1020 = vmatprep.mubr.bf16.mxu0 %v239
        %1021 = vmatmul.mubr.bf16.gmra.mrb[0].mxu0 %v238
        %v1022 = vpop.f32.mrb[0].mxu0
        %v1023 = vadd.f32 0.0, %v1022
        %v1024 = vpop.f32.mrb[0].mxu0
        %v1025 = vpop.f32.mrb[0].mxu0
        %v1026 = vadd.f32 0.0, %v1025
        %v1027 = vpop.f32.mrb[0].mxu0
        %1028 = vmatprep.mubr.bf16.mxu0 %v242
        %1029 = vmatmul.mubr.bf16.gmra.mrb[0].mxu0 %v241
        %v1030 = vpop.f32.mrb[0].mxu0
        %v1031 = vadd.f32 0.0, %v1030
        %v1032 = vpop.f32.mrb[0].mxu0
        %v1033 = vpop.f32.mrb[0].mxu0
        %v1034 = vadd.f32 0.0, %v1033
        %v1035 = vpop.f32.mrb[0].mxu0
        %1036 = vmatprep.mubr.bf16.mxu0 %v245
        %1037 = vmatmul.mubr.bf16.gmra.mrb[0].mxu0 %v244
        %v1038 = vpop.f32.mrb[0].mxu0
        %v1039 = vadd.f32 0.0, %v1038
        %v1040 = vpop.f32.mrb[0].mxu0
        %v1041 = vpop.f32.mrb[0].mxu0
        %v1042 = vadd.f32 0.0, %v1041
        %v1043 = vpop.f32.mrb[0].mxu0
        %1044 = vmatprep.mubr.bf16.mxu0 %v248
        %1045 = vmatmul.mubr.bf16.gmra.mrb[0].mxu0 %v247
        %v1046 = vpop.f32.mrb[0].mxu0
        %v1047 = vadd.f32 0.0, %v1046
        %v1048 = vpop.f32.mrb[0].mxu0
        %v1049 = vpop.f32.mrb[0].mxu0
        %v1050 = vadd.f32 0.0, %v1049
        %v1051 = vpop.f32.mrb[0].mxu0
        %1052 = vdwg.mxu0
        %1053 = vmatprep.subr.bf16.mxu0 0
        %1054 = vmatpush1.bf16.msra.mxu0 %v636
        %1055 = vmatprep.subr.bf16.mxu0 0
        %1056 = vmatpush1.bf16.msra.mxu0 %v639
        %1057 = vmatprep.subr.bf16.mxu0 0
        %1058 = vmatpush1.bf16.msra.mxu0 %v642
        %1059 = vmatprep.subr.bf16.mxu0 0
        %1060 = vmatpush1.bf16.msra.mxu0 %v645
        %1061 = vmatprep.subr.bf16.mxu0 0
        %1062 = vmatpush1.bf16.msra.mxu0 %v648
        %1063 = vmatprep.subr.bf16.mxu0 0
        %1064 = vmatpush1.bf16.msra.mxu0 %v651
        %1065 = vmatprep.subr.bf16.mxu0 0
        %1066 = vmatpush1.bf16.msra.mxu0 %v654
        %1067 = vmatprep.subr.bf16.mxu0 0
        %1068 = vmatpush1.bf16.msra.mxu0 %v657
        %1069 = vmatprep.subr.bf16.mxu0 0
        %1070 = vmatpush1.bf16.msra.mxu0 0
        %1071 = vmatprep.subr.bf16.mxu0 0
        %1072 = vmatpush1.bf16.msra.mxu0 0
        %1073 = vmatprep.subr.bf16.mxu0 0
        %1074 = vmatpush1.bf16.msra.mxu0 0
        %1075 = vmatprep.subr.bf16.mxu0 0
        %1076 = vmatpush1.bf16.msra.mxu0 0
        %1077 = vmatprep.subr.bf16.mxu0 0
        %1078 = vmatpush1.bf16.msra.mxu0 0
        %1079 = vmatprep.subr.bf16.mxu0 0
        %1080 = vmatpush1.bf16.msra.mxu0 0
        %1081 = vmatprep.subr.bf16.mxu0 0
        %1082 = vmatpush1.bf16.msra.mxu0 0
        %1083 = vmatprep.subr.bf16.mxu0 0
        %1084 = vmatpush1.bf16.msra.mxu0 0
        %1085 = vmatprep.mubr.bf16.mxu0 0
        %1086 = vmatmul.mubr.bf16.gmra.mrb[0].mxu0 %v228
        %v1087 = vpop.f32.mrb[0].mxu0
        %v1088 = vadd.f32 %v991, %v1087
        %v1089 = vpop.f32.mrb[0].mxu0
        %v1090 = vpop.f32.mrb[0].mxu0
        %v1091 = vadd.f32 %v994, %v1090
        %v1092 = vpop.f32.mrb[0].mxu0
        %1093 = vmatprep.mubr.bf16.mxu0 0
        %1094 = vmatmul.mubr.bf16.gmra.mrb[0].mxu0 %v231
        %v1095 = vpop.f32.mrb[0].mxu0
        %v1096 = vadd.f32 %v999, %v1095
        %v1097 = vpop.f32.mrb[0].mxu0
        %v1098 = vpop.f32.mrb[0].mxu0
        %v1099 = vadd.f32 %v1002, %v1098
        %v1100 = vpop.f32.mrb[0].mxu0
        %1101 = vmatprep.mubr.bf16.mxu0 0
        %1102 = vmatmul.mubr.bf16.gmra.mrb[0].mxu0 %v234
        %v1103 = vpop.f32.mrb[0].mxu0
        %v1104 = vadd.f32 %v1007, %v1103
        %v1105 = vpop.f32.mrb[0].mxu0
        %v1106 = vpop.f32.mrb[0].mxu0
        %v1107 = vadd.f32 %v1010, %v1106
        %v1108 = vpop.f32.mrb[0].mxu0
        %1109 = vmatprep.mubr.bf16.mxu0 0
        %1110 = vmatmul.mubr.bf16.gmra.mrb[0].mxu0 %v237
        %v1111 = vpop.f32.mrb[0].mxu0
        %v1112 = vadd.f32 %v1015, %v1111
        %v1113 = vpop.f32.mrb[0].mxu0
        %v1114 = vpop.f32.mrb[0].mxu0
        %v1115 = vadd.f32 %v1018, %v1114
        %v1116 = vpop.f32.mrb[0].mxu0
        %1117 = vmatprep.mubr.bf16.mxu0 0
        %1118 = vmatmul.mubr.bf16.gmra.mrb[0].mxu0 %v240
        %v1119 = vpop.f32.mrb[0].mxu0
        %v1120 = vadd.f32 %v1023, %v1119
        %v1121 = vpop.f32.mrb[0].mxu0
        %v1122 = vpop.f32.mrb[0].mxu0
        %v1123 = vadd.f32 %v1026, %v1122
        %v1124 = vpop.f32.mrb[0].mxu0
        %1125 = vmatprep.mubr.bf16.mxu0 0
        %1126 = vmatmul.mubr.bf16.gmra.mrb[0].mxu0 %v243
        %v1127 = vpop.f32.mrb[0].mxu0
        %v1128 = vadd.f32 %v1031, %v1127
        %v1129 = vpop.f32.mrb[0].mxu0
        %v1130 = vpop.f32.mrb[0].mxu0
        %v1131 = vadd.f32 %v1034, %v1130
        %v1132 = vpop.f32.mrb[0].mxu0
        %1133 = vmatprep.mubr.bf16.mxu0 0
        %1134 = vmatmul.mubr.bf16.gmra.mrb[0].mxu0 %v246
        %v1135 = vpop.f32.mrb[0].mxu0
        %v1136 = vadd.f32 %v1039, %v1135
        %v1137 = vpop.f32.mrb[0].mxu0
        %v1138 = vpop.f32.mrb[0].mxu0
        %v1139 = vadd.f32 %v1042, %v1138
        %v1140 = vpop.f32.mrb[0].mxu0
        %1141 = vmatprep.mubr.bf16.mxu0 0
        %1142 = vmatmul.mubr.bf16.gmra.mrb[0].mxu0 %v249
        %v1143 = vpop.f32.mrb[0].mxu0
        %v1144 = vadd.f32 %v1047, %v1143
        %v1145 = vpop.f32.mrb[0].mxu0
        %v1146 = vpop.f32.mrb[0].mxu0
        %v1147 = vadd.f32 %v1050, %v1146
        %v1148 = vpop.f32.mrb[0].mxu0
        %1149 = vdwg.mxu0
        %v1150 = vpack.c.bf16 %v884, %v880
        %v1151 = vpack.c.bf16 %v894, %v890
        %v1152 = vpack.c.bf16 %v904, %v900
        %v1153 = vpack.c.bf16 %v914, %v910
        %v1154 = vpack.c.bf16 %v924, %v920
        %v1155 = vpack.c.bf16 %v934, %v930
        %v1156 = vpack.c.bf16 %v944, %v940
        %v1157 = vpack.c.bf16 %v954, %v950
        %v1158 = vpack.c.bf16 %v882, %v878
        %v1159 = vpack.c.bf16 %v892, %v888
        %v1160 = vpack.c.bf16 %v902, %v898
        %v1161 = vpack.c.bf16 %v912, %v908
        %v1162 = vpack.c.bf16 %v922, %v918
        %v1163 = vpack.c.bf16 %v932, %v928
        %v1164 = vpack.c.bf16 %v942, %v938
        %v1165 = vpack.c.bf16 %v952, %v948
        %1166 = vmatprep.subr.bf16.mxu0 0
        %1167 = vmatpush1.bf16.xpose.msra.mxu0 %v1158
        %1168 = vmatprep.subr.bf16.mxu0 0
        %1169 = vmatpush1.bf16.xpose.msra.mxu0 %v1159
        %1170 = vmatprep.subr.bf16.mxu0 0
        %1171 = vmatpush1.bf16.xpose.msra.mxu0 %v1160
        %1172 = vmatprep.subr.bf16.mxu0 0
        %1173 = vmatpush1.bf16.xpose.msra.mxu0 %v1161
        %1174 = vmatprep.subr.bf16.mxu0 0
        %1175 = vmatpush1.bf16.xpose.msra.mxu0 %v1162
        %1176 = vmatprep.subr.bf16.mxu0 0
        %1177 = vmatpush1.bf16.xpose.msra.mxu0 %v1163
        %1178 = vmatprep.subr.bf16.mxu0 0
        %1179 = vmatpush1.bf16.xpose.msra.mxu0 %v1164
        %1180 = vmatprep.subr.bf16.mxu0 0
        %1181 = vmatpush1.bf16.xpose.msra.mxu0 %v1165
        %1182 = vmatprep.subr.bf16.mxu0 0
        %1183 = vmatpush1.bf16.xpose.msra.mxu0 0
        %1184 = vmatprep.subr.bf16.mxu0 0
        %1185 = vmatpush1.bf16.xpose.msra.mxu0 0
        %1186 = vmatprep.subr.bf16.mxu0 0
        %1187 = vmatpush1.bf16.xpose.msra.mxu0 0
        %1188 = vmatprep.subr.bf16.mxu0 0
        %1189 = vmatpush1.bf16.xpose.msra.mxu0 0
        %1190 = vmatprep.subr.bf16.mxu0 0
        %1191 = vmatpush1.bf16.xpose.msra.mxu0 0
        %1192 = vmatprep.subr.bf16.mxu0 0
        %1193 = vmatpush1.bf16.xpose.msra.mxu0 0
        %1194 = vmatprep.subr.bf16.mxu0 0
        %1195 = vmatpush1.bf16.xpose.msra.mxu0 0
        %1196 = vmatprep.subr.bf16.mxu0 0
        %1197 = vmatpush1.bf16.xpose.msra.mxu0 0
        %1198 = vmatprep.mubr.bf16.mxu0 0
        %1199 = vmatmul.mubr.bf16.gmra.mrb[0].mxu0 %v1150
        %v1200 = vpop.f32.mrb[0].mxu0
        %v1201 = vadd.f32 0.0, %v1200
        %v1202 = vpop.f32.mrb[0].mxu0
        %v1203 = vpop.f32.mrb[0].mxu0
        %v1204 = vadd.f32 0.0, %v1203
        %v1205 = vpop.f32.mrb[0].mxu0
        %1206 = vmatprep.mubr.bf16.mxu0 0
        %1207 = vmatmul.mubr.bf16.gmra.mrb[0].mxu0 %v1151
        %v1208 = vpop.f32.mrb[0].mxu0
        %v1209 = vadd.f32 0.0, %v1208
        %v1210 = vpop.f32.mrb[0].mxu0
        %v1211 = vpop.f32.mrb[0].mxu0
        %v1212 = vadd.f32 0.0, %v1211
        %v1213 = vpop.f32.mrb[0].mxu0
        %1214 = vmatprep.mubr.bf16.mxu0 0
        %1215 = vmatmul.mubr.bf16.gmra.mrb[0].mxu0 %v1152
        %v1216 = vpop.f32.mrb[0].mxu0
        %v1217 = vadd.f32 0.0, %v1216
        %v1218 = vpop.f32.mrb[0].mxu0
        %v1219 = vpop.f32.mrb[0].mxu0
        %v1220 = vadd.f32 0.0, %v1219
        %v1221 = vpop.f32.mrb[0].mxu0
        %1222 = vmatprep.mubr.bf16.mxu0 0
        %1223 = vmatmul.mubr.bf16.gmra.mrb[0].mxu0 %v1153
        %v1224 = vpop.f32.mrb[0].mxu0
        %v1225 = vadd.f32 0.0, %v1224
        %v1226 = vpop.f32.mrb[0].mxu0
        %v1227 = vpop.f32.mrb[0].mxu0
        %v1228 = vadd.f32 0.0, %v1227
        %v1229 = vpop.f32.mrb[0].mxu0
        %1230 = vmatprep.mubr.bf16.mxu0 0
        %1231 = vmatmul.mubr.bf16.gmra.mrb[0].mxu0 %v1154
        %v1232 = vpop.f32.mrb[0].mxu0
        %v1233 = vadd.f32 0.0, %v1232
        %v1234 = vpop.f32.mrb[0].mxu0
        %v1235 = vpop.f32.mrb[0].mxu0
        %v1236 = vadd.f32 0.0, %v1235
        %v1237 = vpop.f32.mrb[0].mxu0
        %1238 = vmatprep.mubr.bf16.mxu0 0
        %1239 = vmatmul.mubr.bf16.gmra.mrb[0].mxu0 %v1155
        %v1240 = vpop.f32.mrb[0].mxu0
        %v1241 = vadd.f32 0.0, %v1240
        %v1242 = vpop.f32.mrb[0].mxu0
        %v1243 = vpop.f32.mrb[0].mxu0
        %v1244 = vadd.f32 0.0, %v1243
        %v1245 = vpop.f32.mrb[0].mxu0
        %1246 = vmatprep.mubr.bf16.mxu0 0
        %1247 = vmatmul.mubr.bf16.gmra.mrb[0].mxu0 %v1156
        %v1248 = vpop.f32.mrb[0].mxu0
        %v1249 = vadd.f32 0.0, %v1248
        %v1250 = vpop.f32.mrb[0].mxu0
        %v1251 = vpop.f32.mrb[0].mxu0
        %v1252 = vadd.f32 0.0, %v1251
        %v1253 = vpop.f32.mrb[0].mxu0
        %1254 = vmatprep.mubr.bf16.mxu0 0
        %1255 = vmatmul.mubr.bf16.gmra.mrb[0].mxu0 %v1157
        %v1256 = vpop.f32.mrb[0].mxu0
        %v1257 = vadd.f32 0.0, %v1256
        %v1258 = vpop.f32.mrb[0].mxu0
        %v1259 = vpop.f32.mrb[0].mxu0
        %v1260 = vadd.f32 0.0, %v1259
        %v1261 = vpop.f32.mrb[0].mxu0
        %1262 = vdwg.mxu0
        %v1263 = vlaneseq
        %v1264 = vshrl.u32 %v1263, 7
        %v1265 = vadd.s32 %v1264, 8
        %v1266 = vadd.s32 %v1264, 16
        %v1267 = vadd.s32 %v1264, 24
        %v1268 = vadd.s32 %v1264, 32
        %v1269 = vadd.s32 %v1264, 40
        %v1270 = vadd.s32 %v1264, 48
        %v1271 = vadd.s32 %v1264, 56
        %v1272 = vadd.s32 %v1264, 64
        %v1273 = vadd.s32 %v1264, 72
        %v1274 = vadd.s32 %v1264, 80
        %v1275 = vadd.s32 %v1264, 88
        %v1276 = vadd.s32 %v1264, 96
        %v1277 = vadd.s32 %v1264, 104
        %v1278 = vadd.s32 %v1264, 112
        %v1279 = vadd.s32 %v1264, 120
        %v1280 = vlaneseq
        %v1281 = vand.u32 %v1280, 127
        %vm1282 = vcmp.le.s32.totalorder %v1281, %v1264
        %vm1283 = vcmp.le.s32.totalorder %v1281, %v1265
        %vm1284 = vcmp.le.s32.totalorder %v1281, %v1266
        %vm1285 = vcmp.le.s32.totalorder %v1281, %v1267
        %vm1286 = vcmp.le.s32.totalorder %v1281, %v1268
        %vm1287 = vcmp.le.s32.totalorder %v1281, %v1269
        %vm1288 = vcmp.le.s32.totalorder %v1281, %v1270
        %vm1289 = vcmp.le.s32.totalorder %v1281, %v1271
        %vm1290 = vcmp.le.s32.totalorder %v1281, %v1272
        %vm1291 = vcmp.le.s32.totalorder %v1281, %v1273
        %vm1292 = vcmp.le.s32.totalorder %v1281, %v1274
        %vm1293 = vcmp.le.s32.totalorder %v1281, %v1275
        %vm1294 = vcmp.le.s32.totalorder %v1281, %v1276
        %vm1295 = vcmp.le.s32.totalorder %v1281, %v1277
        %vm1296 = vcmp.le.s32.totalorder %v1281, %v1278
        %vm1297 = vcmp.le.s32.totalorder %v1281, %v1279
        %v1298 = vsel %vm1282, %v1201, -inf
        %v1299 = vsel %vm1283, %v1204, -inf
        %v1300 = vsel %vm1284, %v1209, -inf
        %v1301 = vsel %vm1285, %v1212, -inf
        %v1302 = vsel %vm1286, %v1217, -inf
        %v1303 = vsel %vm1287, %v1220, -inf
        %v1304 = vsel %vm1288, %v1225, -inf
        %v1305 = vsel %vm1289, %v1228, -inf
        %v1306 = vsel %vm1290, %v1233, -inf
        %v1307 = vsel %vm1291, %v1236, -inf
        %v1308 = vsel %vm1292, %v1241, -inf
        %v1309 = vsel %vm1293, %v1244, -inf
        %v1310 = vsel %vm1294, %v1249, -inf
        %v1311 = vsel %vm1295, %v1252, -inf
        %v1312 = vsel %vm1296, %v1257, -inf
        %v1313 = vsel %vm1297, %v1260, -inf
        %1314 = vmax.xlane.f32.xlu0 %v1298
        %v1315 = vpop.xlane.xlu0 %1314
        %1316 = vmax.xlane.f32.xlu0 %v1299
        %v1317 = vpop.xlane.xlu0 %1316
        %1318 = vmax.xlane.f32.xlu0 %v1300
        %v1319 = vpop.xlane.xlu0 %1318
        %1320 = vmax.xlane.f32.xlu0 %v1301
        %v1321 = vpop.xlane.xlu0 %1320
        %1322 = vmax.xlane.f32.xlu0 %v1302
        %v1323 = vpop.xlane.xlu0 %1322
        %1324 = vmax.xlane.f32.xlu0 %v1303
        %v1325 = vpop.xlane.xlu0 %1324
        %1326 = vmax.xlane.f32.xlu0 %v1304
        %v1327 = vpop.xlane.xlu0 %1326
        %1328 = vmax.xlane.f32.xlu0 %v1305
        %v1329 = vpop.xlane.xlu0 %1328
        %1330 = vmax.xlane.f32.xlu0 %v1306
        %v1331 = vpop.xlane.xlu0 %1330
        %1332 = vmax.xlane.f32.xlu0 %v1307
        %v1333 = vpop.xlane.xlu0 %1332
        %1334 = vmax.xlane.f32.xlu0 %v1308
        %v1335 = vpop.xlane.xlu0 %1334
        %1336 = vmax.xlane.f32.xlu0 %v1309
        %v1337 = vpop.xlane.xlu0 %1336
        %1338 = vmax.xlane.f32.xlu0 %v1310
        %v1339 = vpop.xlane.xlu0 %1338
        %1340 = vmax.xlane.f32.xlu0 %v1311
        %v1341 = vpop.xlane.xlu0 %1340
        %1342 = vmax.xlane.f32.xlu0 %v1312
        %v1343 = vpop.xlane.xlu0 %1342
        %1344 = vmax.xlane.f32.xlu0 %v1313
        %v1345 = vpop.xlane.xlu0 %1344
        %v1346 = vsub.f32 %v1298, %v1315
        %v1347 = vsub.f32 %v1299, %v1317
        %v1348 = vsub.f32 %v1300, %v1319
        %v1349 = vsub.f32 %v1301, %v1321
        %v1350 = vsub.f32 %v1302, %v1323
        %v1351 = vsub.f32 %v1303, %v1325
        %v1352 = vsub.f32 %v1304, %v1327
        %v1353 = vsub.f32 %v1305, %v1329
        %v1354 = vsub.f32 %v1306, %v1331
        %v1355 = vsub.f32 %v1307, %v1333
        %v1356 = vsub.f32 %v1308, %v1335
        %v1357 = vsub.f32 %v1309, %v1337
        %v1358 = vsub.f32 %v1310, %v1339
        %v1359 = vsub.f32 %v1311, %v1341
        %v1360 = vsub.f32 %v1312, %v1343
        %v1361 = vsub.f32 %v1313, %v1345
        %v1362 = vmul.f32 %v1346, 1.442695
        %v1363 = vpow.pop %v1362
        %v1364 = vmul.f32 %v1347, 1.442695
        %v1365 = vpow.pop %v1364
        %v1366 = vmul.f32 %v1348, 1.442695
        %v1367 = vpow.pop %v1366
        %v1368 = vmul.f32 %v1349, 1.442695
        %v1369 = vpow.pop %v1368
        %v1370 = vmul.f32 %v1350, 1.442695
        %v1371 = vpow.pop %v1370
        %v1372 = vmul.f32 %v1351, 1.442695
        %v1373 = vpow.pop %v1372
        %v1374 = vmul.f32 %v1352, 1.442695
        %v1375 = vpow.pop %v1374
        %v1376 = vmul.f32 %v1353, 1.442695
        %v1377 = vpow.pop %v1376
        %v1378 = vmul.f32 %v1354, 1.442695
        %v1379 = vpow.pop %v1378
        %v1380 = vmul.f32 %v1355, 1.442695
        %v1381 = vpow.pop %v1380
        %v1382 = vmul.f32 %v1356, 1.442695
        %v1383 = vpow.pop %v1382
        %v1384 = vmul.f32 %v1357, 1.442695
        %v1385 = vpow.pop %v1384
        %v1386 = vmul.f32 %v1358, 1.442695
        %v1387 = vpow.pop %v1386
        %v1388 = vmul.f32 %v1359, 1.442695
        %v1389 = vpow.pop %v1388
        %v1390 = vmul.f32 %v1360, 1.442695
        %v1391 = vpow.pop %v1390
        %v1392 = vmul.f32 %v1361, 1.442695
        %v1393 = vpow.pop %v1392
        %1394 = vadd.xlane.f32.xlu0 %v1363
        %v1395 = vpop.xlane.xlu0 %1394
        %1396 = vadd.xlane.f32.xlu0 %v1365
        %v1397 = vpop.xlane.xlu0 %1396
        %1398 = vadd.xlane.f32.xlu0 %v1367
        %v1399 = vpop.xlane.xlu0 %1398
        %1400 = vadd.xlane.f32.xlu0 %v1369
        %v1401 = vpop.xlane.xlu0 %1400
        %1402 = vadd.xlane.f32.xlu0 %v1371
        %v1403 = vpop.xlane.xlu0 %1402
        %1404 = vadd.xlane.f32.xlu0 %v1373
        %v1405 = vpop.xlane.xlu0 %1404
        %1406 = vadd.xlane.f32.xlu0 %v1375
        %v1407 = vpop.xlane.xlu0 %1406
        %1408 = vadd.xlane.f32.xlu0 %v1377
        %v1409 = vpop.xlane.xlu0 %1408
        %1410 = vadd.xlane.f32.xlu0 %v1379
        %v1411 = vpop.xlane.xlu0 %1410
        %1412 = vadd.xlane.f32.xlu0 %v1381
        %v1413 = vpop.xlane.xlu0 %1412
        %1414 = vadd.xlane.f32.xlu0 %v1383
        %v1415 = vpop.xlane.xlu0 %1414
        %1416 = vadd.xlane.f32.xlu0 %v1385
        %v1417 = vpop.xlane.xlu0 %1416
        %1418 = vadd.xlane.f32.xlu0 %v1387
        %v1419 = vpop.xlane.xlu0 %1418
        %1420 = vadd.xlane.f32.xlu0 %v1389
        %v1421 = vpop.xlane.xlu0 %1420
        %1422 = vadd.xlane.f32.xlu0 %v1391
        %v1423 = vpop.xlane.xlu0 %1422
        %1424 = vadd.xlane.f32.xlu0 %v1393
        %v1425 = vpop.xlane.xlu0 %1424
        %v1426 = vpack.c.bf16 %v1365, %v1363
        %v1427 = vpack.c.bf16 %v1369, %v1367
        %v1428 = vpack.c.bf16 %v1373, %v1371
        %v1429 = vpack.c.bf16 %v1377, %v1375
        %v1430 = vpack.c.bf16 %v1381, %v1379
        %v1431 = vpack.c.bf16 %v1385, %v1383
        %v1432 = vpack.c.bf16 %v1389, %v1387
        %v1433 = vpack.c.bf16 %v1393, %v1391
        %v1434 = vpack.c.bf16 %v1091, %v1088
        %v1435 = vpack.c.bf16 %v1099, %v1096
        %v1436 = vpack.c.bf16 %v1107, %v1104
        %v1437 = vpack.c.bf16 %v1115, %v1112
        %v1438 = vpack.c.bf16 %v1123, %v1120
        %v1439 = vpack.c.bf16 %v1131, %v1128
        %v1440 = vpack.c.bf16 %v1139, %v1136
        %v1441 = vpack.c.bf16 %v1147, %v1144
        %1442 = vmatprep.subr.bf16.mxu0 0
        %1443 = vmatpush1.bf16.msra.mxu0 %v1434
        %1444 = vmatprep.subr.bf16.mxu0 0
        %1445 = vmatpush1.bf16.msra.mxu0 %v1435
        %1446 = vmatprep.subr.bf16.mxu0 0
        %1447 = vmatpush1.bf16.msra.mxu0 %v1436
        %1448 = vmatprep.subr.bf16.mxu0 0
        %1449 = vmatpush1.bf16.msra.mxu0 %v1437
        %1450 = vmatprep.subr.bf16.mxu0 0
        %1451 = vmatpush1.bf16.msra.mxu0 %v1438
        %1452 = vmatprep.subr.bf16.mxu0 0
        %1453 = vmatpush1.bf16.msra.mxu0 %v1439
        %1454 = vmatprep.subr.bf16.mxu0 0
        %1455 = vmatpush1.bf16.msra.mxu0 %v1440
        %1456 = vmatprep.subr.bf16.mxu0 0
        %1457 = vmatpush1.bf16.msra.mxu0 %v1441
        %1458 = vmatprep.subr.bf16.mxu0 0
        %1459 = vmatpush1.bf16.msra.mxu0 0
        %1460 = vmatprep.subr.bf16.mxu0 0
        %1461 = vmatpush1.bf16.msra.mxu0 0
        %1462 = vmatprep.subr.bf16.mxu0 0
        %1463 = vmatpush1.bf16.msra.mxu0 0
        %1464 = vmatprep.subr.bf16.mxu0 0
        %1465 = vmatpush1.bf16.msra.mxu0 0
        %1466 = vmatprep.subr.bf16.mxu0 0
        %1467 = vmatpush1.bf16.msra.mxu0 0
        %1468 = vmatprep.subr.bf16.mxu0 0
        %1469 = vmatpush1.bf16.msra.mxu0 0
        %1470 = vmatprep.subr.bf16.mxu0 0
        %1471 = vmatpush1.bf16.msra.mxu0 0
        %1472 = vmatprep.subr.bf16.mxu0 0
        %1473 = vmatpush1.bf16.msra.mxu0 0
        %1474 = vmatprep.mubr.bf16.mxu0 0
        %1475 = vmatmul.mubr.bf16.gmra.mrb[0].mxu0 %v1426
        %v1476 = vpop.f32.mrb[0].mxu0
        %v1477 = vadd.f32 0.0, %v1476
        %v1478 = vpop.f32.mrb[0].mxu0
        %v1479 = vpop.f32.mrb[0].mxu0
        %v1480 = vadd.f32 0.0, %v1479
        %v1481 = vpop.f32.mrb[0].mxu0
        %1482 = vmatprep.mubr.bf16.mxu0 0
        %1483 = vmatmul.mubr.bf16.gmra.mrb[0].mxu0 %v1427
        %v1484 = vpop.f32.mrb[0].mxu0
        %v1485 = vadd.f32 0.0, %v1484
        %v1486 = vpop.f32.mrb[0].mxu0
        %v1487 = vpop.f32.mrb[0].mxu0
        %v1488 = vadd.f32 0.0, %v1487
        %v1489 = vpop.f32.mrb[0].mxu0
        %1490 = vmatprep.mubr.bf16.mxu0 0
        %1491 = vmatmul.mubr.bf16.gmra.mrb[0].mxu0 %v1428
        %v1492 = vpop.f32.mrb[0].mxu0
        %v1493 = vadd.f32 0.0, %v1492
        %v1494 = vpop.f32.mrb[0].mxu0
        %v1495 = vpop.f32.mrb[0].mxu0
        %v1496 = vadd.f32 0.0, %v1495
        %v1497 = vpop.f32.mrb[0].mxu0
        %1498 = vmatprep.mubr.bf16.mxu0 0
        %1499 = vmatmul.mubr.bf16.gmra.mrb[0].mxu0 %v1429
        %v1500 = vpop.f32.mrb[0].mxu0
        %v1501 = vadd.f32 0.0, %v1500
        %v1502 = vpop.f32.mrb[0].mxu0
        %v1503 = vpop.f32.mrb[0].mxu0
        %v1504 = vadd.f32 0.0, %v1503
        %v1505 = vpop.f32.mrb[0].mxu0
        %1506 = vmatprep.mubr.bf16.mxu0 0
        %1507 = vmatmul.mubr.bf16.gmra.mrb[0].mxu0 %v1430
        %v1508 = vpop.f32.mrb[0].mxu0
        %v1509 = vadd.f32 0.0, %v1508
        %v1510 = vpop.f32.mrb[0].mxu0
        %v1511 = vpop.f32.mrb[0].mxu0
        %v1512 = vadd.f32 0.0, %v1511
        %v1513 = vpop.f32.mrb[0].mxu0
        %1514 = vmatprep.mubr.bf16.mxu0 0
        %1515 = vmatmul.mubr.bf16.gmra.mrb[0].mxu0 %v1431
        %v1516 = vpop.f32.mrb[0].mxu0
        %v1517 = vadd.f32 0.0, %v1516
        %v1518 = vpop.f32.mrb[0].mxu0
        %v1519 = vpop.f32.mrb[0].mxu0
        %v1520 = vadd.f32 0.0, %v1519
        %v1521 = vpop.f32.mrb[0].mxu0
        %1522 = vmatprep.mubr.bf16.mxu0 0
        %1523 = vmatmul.mubr.bf16.gmra.mrb[0].mxu0 %v1432
        %v1524 = vpop.f32.mrb[0].mxu0
        %v1525 = vadd.f32 0.0, %v1524
        %v1526 = vpop.f32.mrb[0].mxu0
        %v1527 = vpop.f32.mrb[0].mxu0
        %v1528 = vadd.f32 0.0, %v1527
        %v1529 = vpop.f32.mrb[0].mxu0
        %1530 = vmatprep.mubr.bf16.mxu0 0
        %1531 = vmatmul.mubr.bf16.gmra.mrb[0].mxu0 %v1433
        %v1532 = vpop.f32.mrb[0].mxu0
        %v1533 = vadd.f32 0.0, %v1532
        %v1534 = vpop.f32.mrb[0].mxu0
        %v1535 = vpop.f32.mrb[0].mxu0
        %v1536 = vadd.f32 0.0, %v1535
        %v1537 = vpop.f32.mrb[0].mxu0
        %1538 = vdwg.mxu0
        %v1539 = vrcp.pop %v1395
        %v1540 = vmul.f32 1.0, %v1539
        %v1541 = vrcp.pop %v1397
        %v1542 = vmul.f32 1.0, %v1541
        %v1543 = vrcp.pop %v1399
        %v1544 = vmul.f32 1.0, %v1543
        %v1545 = vrcp.pop %v1401
        %v1546 = vmul.f32 1.0, %v1545
        %v1547 = vrcp.pop %v1403
        %v1548 = vmul.f32 1.0, %v1547
        %v1549 = vrcp.pop %v1405
        %v1550 = vmul.f32 1.0, %v1549
        %v1551 = vrcp.pop %v1407
        %v1552 = vmul.f32 1.0, %v1551
        %v1553 = vrcp.pop %v1409
        %v1554 = vmul.f32 1.0, %v1553
        %v1555 = vrcp.pop %v1411
        %v1556 = vmul.f32 1.0, %v1555
        %v1557 = vrcp.pop %v1413
        %v1558 = vmul.f32 1.0, %v1557
        %v1559 = vrcp.pop %v1415
        %v1560 = vmul.f32 1.0, %v1559
        %v1561 = vrcp.pop %v1417
        %v1562 = vmul.f32 1.0, %v1561
        %v1563 = vrcp.pop %v1419
        %v1564 = vmul.f32 1.0, %v1563
        %v1565 = vrcp.pop %v1421
        %v1566 = vmul.f32 1.0, %v1565
        %v1567 = vrcp.pop %v1423
        %v1568 = vmul.f32 1.0, %v1567
        %v1569 = vrcp.pop %v1425
        %v1570 = vmul.f32 1.0, %v1569
        %v1571 = vmul.f32 %v1477, %v1540
        %v1572 = vmul.f32 %v1480, %v1542
        %v1573 = vmul.f32 %v1485, %v1544
        %v1574 = vmul.f32 %v1488, %v1546
        %v1575 = vmul.f32 %v1493, %v1548
        %v1576 = vmul.f32 %v1496, %v1550
        %v1577 = vmul.f32 %v1501, %v1552
        %v1578 = vmul.f32 %v1504, %v1554
        %v1579 = vmul.f32 %v1509, %v1556
        %v1580 = vmul.f32 %v1512, %v1558
        %v1581 = vmul.f32 %v1517, %v1560
        %v1582 = vmul.f32 %v1520, %v1562
        %v1583 = vmul.f32 %v1525, %v1564
        %v1584 = vmul.f32 %v1528, %v1566
        %v1585 = vmul.f32 %v1533, %v1568
        %v1586 = vmul.f32 %v1536, %v1570
        %1587 = vst [vmem:[%s176] sm:$0xff] %v1571
        %1588 = vst [vmem:[%s176 + $0x8] sm:$0xff] %v1572
        %1589 = vst [vmem:[%s176 + $0x10] sm:$0xff] %v1573
        %1590 = vst [vmem:[%s176 + $0x18] sm:$0xff] %v1574
        %1591 = vst [vmem:[%s176 + $0x20] sm:$0xff] %v1575
        %1592 = vst [vmem:[%s176 + $0x28] sm:$0xff] %v1576
        %1593 = vst [vmem:[%s176 + $0x30] sm:$0xff] %v1577
        %1594 = vst [vmem:[%s176 + $0x38] sm:$0xff] %v1578
        %1595 = vst [vmem:[%s176 + $0x40] sm:$0xff] %v1579
        %1596 = vst [vmem:[%s176 + $0x48] sm:$0xff] %v1580
        %1597 = vst [vmem:[%s176 + $0x50] sm:$0xff] %v1581
        %1598 = vst [vmem:[%s176 + $0x58] sm:$0xff] %v1582
        %1599 = vst [vmem:[%s176 + $0x60] sm:$0xff] %v1583
        %1600 = vst [vmem:[%s176 + $0x68] sm:$0xff] %v1584
        %1601 = vst [vmem:[%s176 + $0x70] sm:$0xff] %v1585
        %1602 = vst [vmem:[%s176 + $0x78] sm:$0xff] %v1586
        %s1603 = sand.u32 %s75, 1
        %s1604 = scalar_lea.sflag [#allocation4], %s1603
        %s1605 = sand.u32 %s75, 1
        %s1606 = smul.addr %s1605, 128
        %s1607 = scalar_lea.vmem [#allocation7], %s1606
        // Predicated region
        $region37: #{tpu_custom_call.1} parent=27 // pred_check
          %p1608 = pneg %p85
        $region38: #{tpu_custom_call.1} parent=27 // pred_check_branch
          %1610 = sbr.rel (%p1608) target = $region40
        $region39: #{tpu_custom_call.1} parent=27 // pred_region
          %s1612 = ssub.s32 2048, 2048
          %1613 = vsyncadd %s1604, %s1612
          %s1614 = smul.addr %s20, 16
          %s1615 = smul.addr %s1614, 128
          %s1616 = scalar_lea.hbm %s2, %s1615
          %s1617 = sshll.u32 %s1607, 4
          %s1618 = int_to_ptr.vmem [resolvable:$true] %s1617
          %1623 = dma.vmem_to_hbm [thread:$0]  %s1618, 2048, %s1616, %s1604, 128, 128, 8
        $region40: #{tpu_custom_call.1} parent=27 // pred_fallthru
          _
      $region28: #{tpu_custom_call.1} parent=5 // pred_fallthru
        _
      %p1624 = scmp.le.s32.totalorder 2, %s15
      // Predicated region
      $region41: #{tpu_custom_call.1} parent=5 // pred_check
        %p1625 = pneg %p1624
      $region42: #{tpu_custom_call.1} parent=5 // pred_check_branch
        %1627 = sbr.rel (%p1625) target = $region44
      $region43: #{tpu_custom_call.1} parent=5 // pred_region
        %s1628 = ssub.s32 %s15, 2
        // Predicated region
        $region45: #{tpu_custom_call.1} parent=43 // pred_check
          %p1629 = pneg %p91
        $region46: #{tpu_custom_call.1} parent=43 // pred_check_branch
          %1631 = sbr.rel (%p1629) target = $region48
        $region47: #{tpu_custom_call.1} parent=43 // pred_region
          %s1632 = sand.u32 %s76, 1
          %s1633 = scalar_lea.sflag [#allocation4], %s1632
          %s1634 = sand.u32 %s76, 1
          %s1635 = smul.addr %s1634, 128
          %s1636 = scalar_lea.vmem [#allocation7], %s1635
          %1637 = dma.done %s1633, 2048
        $region48: #{tpu_custom_call.1} parent=43 // pred_fallthru
          _
      $region44: #{tpu_custom_call.1} parent=5 // pred_fallthru
        _
    $region6: #{tpu_custom_call.1} parent=1 // loop_footer
      %s19 = sadd.s32 1, %s15
    $region7: #{tpu_custom_call.1} parent=1 // loop_footer_branch
      %14 = sbr.rel target = $region3
    $region8: #{tpu_custom_call.1} parent=1 // loop_exit
      _
    %1638 = vsyncpa [#allocation3], 1
    %s1639 = scalar_lea.sflag [#allocation3], 1
    %1640 = vsyncpa %s1639, 1
    %1641 = vsyncpa [#allocation6], 1
    %1642 = vsyncpa [#allocation4], 1
    %s1643 = scalar_lea.sflag [#allocation4], 1
    %1644 = vsyncpa %s1643, 1

</llo_original>
